<compile_context>
chip_gen: v7x
topology: tpu7x:2x2x1
jax: 0.10.0
libtpu: 0.0.40
codegen_flags: <defaults>
</compile_context>

<pallas_src>
import functools

import jax
import jax.numpy as jnp
from jax import lax
from jax.experimental import pallas as pl
from jax.experimental.pallas import tpu as pltpu

TEMPERATURE = 0.07
BASE_TEMPERATURE = 0.07
MARGIN = 0.1


def _sup_margin_con_kernel(anch_ref, featT_ref, labc_ref, labr_ref,
                           denom_ref, psum_ref, *,
                           n_valid, temperature, margin):
    """One (row-block i, column-block j) step of the streamed masked log-softmax.

    Accumulates, per anchor row:
      denom = sum_{valid cols} exp(logit)     (softmax denominator)
      psum  = sum_{positive, valid cols} logit
    with logit = clip(sim - margin*pos, -b, b)/T - b/T, b = 1 - 1e-7.
    The per-row max of the reference is replaced by the static bound b/T
    (log-softmax is shift invariant; logits <= 0 so exp cannot overflow for
    the module's default temperature).
    """
    i = pl.program_id(0)
    j = pl.program_id(1)

    @pl.when(j == 0)
    def _init():
        denom_ref[...] = jnp.zeros_like(denom_ref)
        psum_ref[...] = jnp.zeros_like(psum_ref)

    tm = anch_ref.shape[0]
    tn = featT_ref.shape[1]

    inv_t = 1.0 / temperature
    b_t = (1.0 - 1e-7) * inv_t      # static shift = upper bound of scaled sims
    m_t = margin * inv_t

    # [tm, tn] cosine-similarity tile on the MXU (RHS pre-transposed in wrapper,
    # so this is the natural [M,K]x[K,N] contraction). f32 accumulation.
    sim = jnp.dot(anch_ref[...], featT_ref[...],
                  preferred_element_type=jnp.float32)

    pos = labc_ref[...] == labr_ref[...]              # [tm, tn] positive mask

    # Scaled + statically-shifted logits; margin folded into one select, clamp
    # done in the scaled domain: fewer full-tile VALU ops than the reference.
    base = sim * inv_t - b_t
    lg = jnp.where(pos, base - m_t, base)
    lg = jnp.minimum(jnp.maximum(lg, -2.0 * b_t), 0.0)

    # Validity: drop the self-contrast diagonal and padded columns. Built from
    # [1, tn] / [tm, 1] vectors so only the AND / selects are full-tile ops.
    gcol = j * tn + lax.broadcasted_iota(jnp.int32, (1, tn), 1)   # [1, tn]
    grow = i * tm + lax.broadcasted_iota(jnp.int32, (tm, 1), 0)   # [tm, 1]
    valid = (gcol != grow) & (gcol < n_valid)                     # [tm, tn]
    pos_v = pos & valid

    denom_ref[...] += jnp.sum(jnp.where(valid, jnp.exp(lg), 0.0),
                              axis=1, keepdims=True)
    psum_ref[...] += jnp.sum(jnp.where(pos_v, lg, 0.0),
                             axis=1, keepdims=True)


def sup_margin_con_loss(features, labels, *, temperature=TEMPERATURE,
                        base_temperature=BASE_TEMPERATURE, margin=MARGIN,
                        block_rows=256, block_cols=256,
                        compute_dtype=jnp.bfloat16):
    """SupMarginCon forward (labels + contrast_mode='all' path)."""
    bsz, n_views = features.shape[0], features.shape[1]
    feat = features.reshape(bsz, n_views, -1).astype(jnp.float32)
    d = feat.shape[-1]
    n = bsz * n_views

    # torch.cat(torch.unbind(features, dim=1), dim=0): view-major rows.
    contrast = jnp.transpose(feat, (1, 0, 2)).reshape(n, d)

    # F.normalize(p=2, dim=1, eps=1e-12) via rsqrt, then cast to the MXU dtype.
    sumsq = jnp.sum(contrast * contrast, axis=1, keepdims=True)
    featn = (contrast * lax.rsqrt(jnp.maximum(sumsq, 1e-24))).astype(compute_dtype)

    lab = jnp.tile(labels.reshape(-1).astype(jnp.int32), (n_views,))   # [n]

    tm, tn = block_rows, block_cols
    n_pad_r = -(-n // tm) * tm        # anchor rows padded to the row tile
    n_pad_c = -(-n // tn) * tn        # contrast cols padded to the column tile
    d_pad = -(-d // 128) * 128        # feature dim padded to the lane width

    anchors_p = jnp.pad(featn, ((0, n_pad_r - n), (0, d_pad - d)))
    featT_p = jnp.pad(featn, ((0, n_pad_c - n), (0, d_pad - d))).T   # [d_pad, n_pad_c]
    lab_col = jnp.pad(lab, (0, n_pad_r - n), constant_values=-1).reshape(n_pad_r, 1)
    lab_row = jnp.pad(lab, (0, n_pad_c - n), constant_values=-1).reshape(1, n_pad_c)

    # VMEM budget derived from actual tile sizes (double-buffered feature tiles,
    # lane-padded small blocks, headroom for f32 [tm,tn] intermediates and
    # Mosaic internal scratch), not hard-coded.
    isz = jnp.dtype(compute_dtype).itemsize
    vmem_limit = (2 * (tm * d_pad + d_pad * tn) * isz
                  + 2 * (tm * 128 + 8 * tn) * 4
                  + 2 * 2 * tm * 128 * 4
                  + 16 * tm * tn * 4
                  + (4 << 20))
    vmem_limit = int(min(max(vmem_limit, 16 << 20), 64 << 20))

    kernel = functools.partial(_sup_margin_con_kernel, n_valid=n,
                               temperature=temperature, margin=margin)

    denom, psum = pl.pallas_call(
        kernel,
        out_shape=(jax.ShapeDtypeStruct((n_pad_r, 1), jnp.float32),
                   jax.ShapeDtypeStruct((n_pad_r, 1), jnp.float32)),
        grid=(n_pad_r // tm, n_pad_c // tn),
        in_specs=[
            pl.BlockSpec((tm, d_pad), lambda i, j: (i, 0)),   # anchor rows (resident over j)
            pl.BlockSpec((d_pad, tn), lambda i, j: (0, j)),   # streamed contrast columns
            pl.BlockSpec((tm, 1), lambda i, j: (i, 0)),       # anchor label column block
            pl.BlockSpec((1, tn), lambda i, j: (0, j)),       # contrast label row block
        ],
        out_specs=(pl.BlockSpec((tm, 1), lambda i, j: (i, 0)),
                   pl.BlockSpec((tm, 1), lambda i, j: (i, 0))),
        compiler_params=pltpu.CompilerParams(
            dimension_semantics=("parallel", "arbitrary"),
            vmem_limit_bytes=vmem_limit),
    )(anchors_p, featT_p, lab_col, lab_row)

    denom = denom[:n, 0]
    psum = psum[:n, 0]

    # Positive counts (label multiplicity minus self) + finalize are tiny O(n)
    # ops, done exactly in f32 in the wrapper (no approx reciprocal).
    pos_cnt = jnp.sum(lab[:, None] == lab[None, :], axis=1).astype(jnp.float32) - 1.0
    log_denom = jnp.log(jnp.maximum(denom, jnp.finfo(jnp.float32).tiny))
    mean_lp = psum / jnp.maximum(pos_cnt, 1.0) - log_denom
    row_loss = -(temperature / base_temperature) * mean_lp
    # Rows with zero positives produce NaN in PyTorch; here they contribute 0.
    row_loss = jnp.where(pos_cnt > 0, row_loss, 0.0)
    # Final mean over the N real anchor rows (matches loss.view(...).mean()).
    return jnp.mean(row_loss)


def _reference(features, labels, *, temperature=TEMPERATURE,
               base_temperature=BASE_TEMPERATURE, margin=MARGIN):
    """Pure-JAX f32 mirror of the PyTorch forward, for correctness checking."""
    bsz, n_views = features.shape[0], features.shape[1]
    feat = features.reshape(bsz, n_views, -1).astype(jnp.float32)
    contrast = jnp.concatenate([feat[:, v, :] for v in range(n_views)], axis=0)
    norm = jnp.sqrt(jnp.sum(contrast * contrast, axis=1, keepdims=True))
    contrast = contrast / jnp.maximum(norm, 1e-12)

    lab = labels.reshape(-1, 1)
    mask = jnp.tile((lab == lab.T).astype(jnp.float32), (n_views, n_views))
    n = n_views * bsz

    sim = contrast @ contrast.T
    sim = jnp.clip(sim - margin * mask, -1.0 + 1e-7, 1.0 - 1e-7)
    logits_scaled = sim / temperature
    logits_mask = 1.0 - jnp.eye(n, dtype=jnp.float32)
    mask = mask * logits_mask
    logits = logits_scaled - jnp.max(logits_scaled, axis=1, keepdims=True)
    exp_logits = jnp.exp(logits) * logits_mask
    log_prob = logits - jnp.log(jnp.sum(exp_logits, axis=1, keepdims=True))
    mean_log_prob_pos = jnp.sum(mask * log_prob, axis=1) / jnp.sum(mask, axis=1)
    return jnp.mean(-(temperature / base_temperature) * mean_log_prob_pos)


if __name__ == "__main__":
    key = jax.random.PRNGKey(0)
    bsz, n_views, dim = 8, 2, 32  # small shapes; PyTorch script used bsz=128, 2 views

    features = jax.random.normal(key, (bsz, n_views, dim), dtype=jnp.float32)
    labels = jnp.concatenate([jnp.zeros(bsz // 2, dtype=jnp.int32),
                              jnp.ones(bsz // 2, dtype=jnp.int32)])

    ref = _reference(features, labels)

    # f32-operand run as the tighter correctness gate (normalization, logits and
    # matmul operands all f32), plus the default bf16 production path.
    loss_f32 = jax.block_until_ready(
        sup_margin_con_loss(features, labels, compute_dtype=jnp.float32))
    loss_bf16 = jax.block_until_ready(sup_margin_con_loss(features, labels))

    assert jnp.isfinite(loss_f32), "f32 loss is not finite"
    assert jnp.isfinite(loss_bf16), "bf16 loss is not finite"
    assert jnp.allclose(loss_f32, ref, rtol=1e-2, atol=1e-2), (float(loss_f32), float(ref))
    # bf16 MXU operands introduce ~1e-3..1e-2 absolute error vs the f32 reference.
    assert jnp.allclose(loss_bf16, ref, rtol=5e-2, atol=5e-2), (float(loss_bf16), float(ref))

    print("KERNEL_OK")
</pallas_src>

<mosaic_0001>
module attributes {stable_mosaic.version = 11 : i64} {
  func.func @_sup_margin_con_kernel(%arg0: i32, %arg1: i32, %arg2: memref<256x128xf32, #tpu.memory_space<vmem>>, %arg3: memref<128x256xf32, #tpu.memory_space<vmem>>, %arg4: memref<256x1xi32, #tpu.memory_space<vmem>>, %arg5: memref<1x256xi32, #tpu.memory_space<vmem>>, %arg6: memref<256x1xf32, #tpu.memory_space<vmem>>, %arg7: memref<256x1xf32, #tpu.memory_space<vmem>>) attributes {dimension_semantics = [#tpu.dimension_semantics<parallel>, #tpu.dimension_semantics<arbitrary>], iteration_bounds = array<i64: 1, 1>, scalar_prefetch = 0 : i64, scratch_operands = 0 : i64, tpu.core_type = #tpu.core_type<tc>, window_params = [{transform_indices = @transform_0, window_bounds = array<i64: 256, 128>}, {transform_indices = @transform_1, window_bounds = array<i64: 128, 256>}, {transform_indices = @transform_2, window_bounds = array<i64: 256, 1>}, {transform_indices = @transform_3, window_bounds = array<i64: 1, 256>}, {transform_indices = @transform_4, window_bounds = array<i64: 256, 1>}, {transform_indices = @transform_5, window_bounds = array<i64: 256, 1>}]} {
    %c0_i32 = arith.constant 0 : i32
    %0 = arith.cmpi eq, %arg1, %c0_i32 : i32
    %1 = arith.extui %0 : i1 to i32
    %c0_i32_0 = arith.constant 0 : i32
    %2 = arith.cmpi ne, %1, %c0_i32_0 : i32
    scf.if %2 {
      %cst_26 = arith.constant 0.000000e+00 : f32
      %53 = vector.broadcast %cst_26 : f32 to vector<256x1xf32>
      %c0_27 = arith.constant 0 : index
      %c0_28 = arith.constant 0 : index
      %54 = vector.load %arg6[%c0_27, %c0_28] : memref<256x1xf32, #tpu.memory_space<vmem>>, vector<256x1xf32>
      tpu.vector_store %arg6[%c0_27, %c0_28], %53 {strides = array<i32>} : memref<256x1xf32, #tpu.memory_space<vmem>>, vector<256x1xf32>,
      %cst_29 = arith.constant 0.000000e+00 : f32
      %55 = vector.broadcast %cst_29 : f32 to vector<256x1xf32>
      %c0_30 = arith.constant 0 : index
      %c0_31 = arith.constant 0 : index
      %56 = vector.load %arg7[%c0_30, %c0_31] : memref<256x1xf32, #tpu.memory_space<vmem>>, vector<256x1xf32>
      tpu.vector_store %arg7[%c0_30, %c0_31], %55 {strides = array<i32>} : memref<256x1xf32, #tpu.memory_space<vmem>>, vector<256x1xf32>,
    } else {
    }
    %c0 = arith.constant 0 : index
    %c0_1 = arith.constant 0 : index
    %3 = vector.load %arg2[%c0, %c0_1] : memref<256x128xf32, #tpu.memory_space<vmem>>, vector<256x128xf32>
    %c0_2 = arith.constant 0 : index
    %c0_3 = arith.constant 0 : index
    %4 = vector.load %arg3[%c0_2, %c0_3] : memref<128x256xf32, #tpu.memory_space<vmem>>, vector<128x256xf32>
    %cst = arith.constant dense<0.000000e+00> : vector<256x256xf32>
    %5 = tpu.matmul %3, %4, %cst {dimension_numbers = #tpu.dot_dimension_numbers<[1], [0], [0], [1], [0, 0, 1, 1], [], []>} : vector<256x128xf32>, vector<128x256xf32>, vector<256x256xf32> -> vector<256x256xf32>
    %c0_4 = arith.constant 0 : index
    %c0_5 = arith.constant 0 : index
    %6 = vector.load %arg4[%c0_4, %c0_5] : memref<256x1xi32, #tpu.memory_space<vmem>>, vector<256x1xi32>
    %c0_6 = arith.constant 0 : index
    %c0_7 = arith.constant 0 : index
    %7 = vector.load %arg5[%c0_6, %c0_7] : memref<1x256xi32, #tpu.memory_space<vmem>>, vector<1x256xi32>
    %8 = vector.broadcast %6 : vector<256x1xi32> to vector<256x256xi32>
    %9 = vector.broadcast %7 : vector<1x256xi32> to vector<256x256xi32>
    %10 = arith.cmpi eq, %8, %9 : vector<256x256xi32>
    %cst_8 = arith.constant 14.2857141 : f32
    %11 = vector.broadcast %cst_8 : f32 to vector<256x256xf32>
    %12 = arith.mulf %5, %11 : vector<256x256xf32>
    %cst_9 = arith.constant 14.2857132 : f32
    %13 = vector.broadcast %cst_9 : f32 to vector<256x256xf32>
    %14 = arith.subf %12, %13 : vector<256x256xf32>
    %cst_10 = arith.constant 1.42857146 : f32
    %15 = vector.broadcast %cst_10 : f32 to vector<256x256xf32>
    %16 = arith.subf %14, %15 : vector<256x256xf32>
    %17 = arith.select %10, %16, %14 : vector<256x256xi1>, vector<256x256xf32>
    %cst_11 = arith.constant -28.5714264 : f32
    %18 = vector.broadcast %cst_11 : f32 to vector<256x256xf32>
    %19 = arith.maximumf %17, %18 : vector<256x256xf32>
    %cst_12 = arith.constant 0.000000e+00 : f32
    %20 = vector.broadcast %cst_12 : f32 to vector<256x256xf32>
    %21 = arith.minimumf %19, %20 : vector<256x256xf32>
    %c256_i32 = arith.constant 256 : i32
    %22 = arith.muli %arg1, %c256_i32 : i32
    %23 = tpu.iota {dimensions = array<i32: 1>} : vector<1x256xi32>
    %24 = vector.broadcast %22 : i32 to vector<1x256xi32>
    %25 = arith.addi %24, %23 : vector<1x256xi32>
    %c256_i32_13 = arith.constant 256 : i32
    %26 = arith.muli %arg0, %c256_i32_13 : i32
    %27 = tpu.iota {dimensions = array<i32: 0>} : vector<256x1xi32>
    %28 = vector.broadcast %26 : i32 to vector<256x1xi32>
    %29 = arith.addi %28, %27 : vector<256x1xi32>
    %30 = vector.broadcast %25 : vector<1x256xi32> to vector<256x256xi32>
    %31 = vector.broadcast %29 : vector<256x1xi32> to vector<256x256xi32>
    %32 = arith.cmpi ne, %30, %31 : vector<256x256xi32>
    %c16_i32 = arith.constant 16 : i32
    %33 = vector.broadcast %c16_i32 : i32 to vector<1x256xi32>
    %34 = arith.cmpi slt, %25, %33 : vector<1x256xi32>
    %35 = vector.broadcast %34 : vector<1x256xi1> to vector<256x256xi1>
    %36 = arith.andi %32, %35 : vector<256x256xi1>
    %37 = arith.andi %10, %36 : vector<256x256xi1>
    %c0_14 = arith.constant 0 : index
    %c0_15 = arith.constant 0 : index
    %38 = vector.load %arg6[%c0_14, %c0_15] : memref<256x1xf32, #tpu.memory_space<vmem>>, vector<256x1xf32>
    %39 = math.exp %21 : vector<256x256xf32>
    %cst_16 = arith.constant 0.000000e+00 : f32
    %40 = vector.broadcast %cst_16 : f32 to vector<256x256xf32>
    %41 = arith.select %36, %39, %40 : vector<256x256xi1>, vector<256x256xf32>
    %cst_17 = arith.constant dense<0.000000e+00> : vector<256xf32>
    %42 = vector.multi_reduction <add>, %41, %cst_17 [1] : vector<256x256xf32> to vector<256xf32>
    %43 = vector.shape_cast %42 : vector<256xf32> to vector<256x1xf32>
    %44 = arith.addf %38, %43 : vector<256x1xf32>
    %c0_18 = arith.constant 0 : index
    %c0_19 = arith.constant 0 : index
    %45 = vector.load %arg6[%c0_18, %c0_19] : memref<256x1xf32, #tpu.memory_space<vmem>>, vector<256x1xf32>
    tpu.vector_store %arg6[%c0_18, %c0_19], %44 {strides = array<i32>} : memref<256x1xf32, #tpu.memory_space<vmem>>, vector<256x1xf32>,
    %c0_20 = arith.constant 0 : index
    %c0_21 = arith.constant 0 : index
    %46 = vector.load %arg7[%c0_20, %c0_21] : memref<256x1xf32, #tpu.memory_space<vmem>>, vector<256x1xf32>
    %cst_22 = arith.constant 0.000000e+00 : f32
    %47 = vector.broadcast %cst_22 : f32 to vector<256x256xf32>
    %48 = arith.select %37, %21, %47 : vector<256x256xi1>, vector<256x256xf32>
    %cst_23 = arith.constant dense<0.000000e+00> : vector<256xf32>
    %49 = vector.multi_reduction <add>, %48, %cst_23 [1] : vector<256x256xf32> to vector<256xf32>
    %50 = vector.shape_cast %49 : vector<256xf32> to vector<256x1xf32>
    %51 = arith.addf %46, %50 : vector<256x1xf32>
    %c0_24 = arith.constant 0 : index
    %c0_25 = arith.constant 0 : index
    %52 = vector.load %arg7[%c0_24, %c0_25] : memref<256x1xf32, #tpu.memory_space<vmem>>, vector<256x1xf32>
    tpu.vector_store %arg7[%c0_24, %c0_25], %51 {strides = array<i32>} : memref<256x1xf32, #tpu.memory_space<vmem>>, vector<256x1xf32>,
    return
  }
  func.func @transform_0(%arg0: i32, %arg1: i32) -> (i32, i32) {
    %c0_i32 = arith.constant 0 : i32
    %c0_i32_0 = arith.constant 0 : i32
    return %arg0, %c0_i32 : i32, i32
  }
  func.func @transform_1(%arg0: i32, %arg1: i32) -> (i32, i32) {
    %c0_i32 = arith.constant 0 : i32
    %c0_i32_0 = arith.constant 0 : i32
    return %c0_i32, %arg1 : i32, i32
  }
  func.func @transform_2(%arg0: i32, %arg1: i32) -> (i32, i32) {
    %c0_i32 = arith.constant 0 : i32
    %c0_i32_0 = arith.constant 0 : i32
    return %arg0, %c0_i32 : i32, i32
  }
  func.func @transform_3(%arg0: i32, %arg1: i32) -> (i32, i32) {
    %c0_i32 = arith.constant 0 : i32
    %c0_i32_0 = arith.constant 0 : i32
    return %c0_i32, %arg1 : i32, i32
  }
  func.func @transform_4(%arg0: i32, %arg1: i32) -> (i32, i32) {
    %c0_i32 = arith.constant 0 : i32
    %c0_i32_0 = arith.constant 0 : i32
    return %arg0, %c0_i32 : i32, i32
  }
  func.func @transform_5(%arg0: i32, %arg1: i32) -> (i32, i32) {
    %c0_i32 = arith.constant 0 : i32
    %c0_i32_0 = arith.constant 0 : i32
    return %arg0, %c0_i32 : i32, i32
  }
}

</mosaic_0001>

<llo_original>
// kernel: tpu_custom_call.1
$region0: #{tpu_custom_call.1}
  #allocation0 [shape = 'u32[]', space=smem, size = 0x4, offset = 0x4, fixed_abs, tag = 'smem constant byte address 0x4 - core index']
  #allocation1 [shape = 'u32[144,128]{1,0:T(1,128)}', space=vmem, size = 0x12000, scoped, tag = 'internal scratch']
  %s0 = inlined_call_operand.vmem [shape: f32[256,128], index: 0, kind: input, shape index: {}]
  %s1 = inlined_call_operand.hbm [shape: f32[128,256], index: 1, kind: input, shape index: {}]
  %s2 = inlined_call_operand.vmem [shape: s32[256,1], index: 2, kind: input, shape index: {}]
  %s3 = inlined_call_operand.vmem [shape: s32[1,256], index: 3, kind: input, shape index: {}]
  %s4 = inlined_call_operand.vmem [shape: f32[256,1], index: 4, kind: output, shape index: {0}]
  %s5 = inlined_call_operand.vmem [shape: f32[256,1], index: 5, kind: output, shape index: {1}]
  %6 = xla_tuple %s4, %s5
  %s7 = sld [smem:[#allocation0]]
  $region42: #{tpu_custom_call.1} parent=0
    _
  %s9 = ssub.s32 1, %s7
  %s10 = scalar_select 0, %s9, %s7
  $region1: #{tpu_custom_call.1} parent=0
    #allocation2 [shape = 'u8[131072]{0}', space=vmem, size = 0x20000, scoped, tag = 'input window, operand 1, single buffered']
    #allocation3 [shape = 's32[1]{0}', space=sflag, size = 0x4, scoped, tag = 'scoped memory for tpu_custom_call.1']
    %11 = vsyncpa [#allocation3], 0
    // Predicated region
    $region2: #{tpu_custom_call.1} parent=1 // pred_check
      _
    $region3: #{tpu_custom_call.1} parent=1 // pred_check_branch
      %13 = sbr.rel (0) target = $region5
    $region4: #{tpu_custom_call.1} parent=1 // pred_region
      _
    $region5: #{tpu_custom_call.1} parent=1 // pred_fallthru
      _
    // Predicated region
    $region6: #{tpu_custom_call.1} parent=1 // pred_check
      _
    $region7: #{tpu_custom_call.1} parent=1 // pred_check_branch
      %15 = sbr.rel (0) target = $region9
    $region8: #{tpu_custom_call.1} parent=1 // pred_region
      %s17 = ssub.s32 4096, 4096
      %18 = vsyncadd [#allocation3], %s17
      %s19 = sshll.u32 [#allocation2], 4
      %s20 = int_to_ptr.vmem [resolvable:$true] %s19
      %25 = dma.hbm_to_vmem [thread:$0]  %s1, 4096, %s20, [#allocation3], 256, 256, 16
    $region9: #{tpu_custom_call.1} parent=1 // pred_fallthru
      _
    // Predicated region
    $region10: #{tpu_custom_call.1} parent=1 // pred_check
      _
    $region11: #{tpu_custom_call.1} parent=1 // pred_check_branch
      %27 = sbr.rel (0) target = $region13
    $region12: #{tpu_custom_call.1} parent=1 // pred_region
      _
    $region13: #{tpu_custom_call.1} parent=1 // pred_fallthru
      _
    // Predicated region
    $region14: #{tpu_custom_call.1} parent=1 // pred_check
      _
    $region15: #{tpu_custom_call.1} parent=1 // pred_check_branch
      %29 = sbr.rel (0) target = $region17
    $region16: #{tpu_custom_call.1} parent=1 // pred_region
      _
    $region17: #{tpu_custom_call.1} parent=1 // pred_fallthru
      _
    // Predicated region
    $region18: #{tpu_custom_call.1} parent=1 // pred_check
      _
    $region19: #{tpu_custom_call.1} parent=1 // pred_check_branch
      %31 = sbr.rel (0) target = $region21
    $region20: #{tpu_custom_call.1} parent=1 // pred_region
      %32 = dma.done [#allocation3], 4096
    $region21: #{tpu_custom_call.1} parent=1 // pred_fallthru
      _
    %p33 = scmp.eq.s32.totalorder 0, 0
    // Predicated region
    $region22: #{tpu_custom_call.1} parent=1 // pred_check
      %p34 = pneg %p33
    $region23: #{tpu_custom_call.1} parent=1 // pred_check_branch
      %36 = sbr.rel (%p34) target = $region25
    $region24: #{tpu_custom_call.1} parent=1 // pred_region
      %vm37 = vcmask 7168
      %38 = vst.msk [vmem:[%s4] sm:$0xff] %vm37, 0.0
      %39 = vst.msk [vmem:[%s4 + $0x8] sm:$0xff] %vm37, 0.0
      %40 = vst.msk [vmem:[%s4 + $0x10] sm:$0xff] %vm37, 0.0
      %41 = vst.msk [vmem:[%s4 + $0x18] sm:$0xff] %vm37, 0.0
      %42 = vst.msk [vmem:[%s4 + $0x20] sm:$0xff] %vm37, 0.0
      %43 = vst.msk [vmem:[%s4 + $0x28] sm:$0xff] %vm37, 0.0
      %44 = vst.msk [vmem:[%s4 + $0x30] sm:$0xff] %vm37, 0.0
      %45 = vst.msk [vmem:[%s4 + $0x38] sm:$0xff] %vm37, 0.0
      %46 = vst.msk [vmem:[%s4 + $0x40] sm:$0xff] %vm37, 0.0
      %47 = vst.msk [vmem:[%s4 + $0x48] sm:$0xff] %vm37, 0.0
      %48 = vst.msk [vmem:[%s4 + $0x50] sm:$0xff] %vm37, 0.0
      %49 = vst.msk [vmem:[%s4 + $0x58] sm:$0xff] %vm37, 0.0
      %50 = vst.msk [vmem:[%s4 + $0x60] sm:$0xff] %vm37, 0.0
      %51 = vst.msk [vmem:[%s4 + $0x68] sm:$0xff] %vm37, 0.0
      %52 = vst.msk [vmem:[%s4 + $0x70] sm:$0xff] %vm37, 0.0
      %53 = vst.msk [vmem:[%s4 + $0x78] sm:$0xff] %vm37, 0.0
      %54 = vst.msk [vmem:[%s4 + $0x80] sm:$0xff] %vm37, 0.0
      %55 = vst.msk [vmem:[%s4 + $0x88] sm:$0xff] %vm37, 0.0
      %56 = vst.msk [vmem:[%s4 + $0x90] sm:$0xff] %vm37, 0.0
      %57 = vst.msk [vmem:[%s4 + $0x98] sm:$0xff] %vm37, 0.0
      %58 = vst.msk [vmem:[%s4 + $0xa0] sm:$0xff] %vm37, 0.0
      %59 = vst.msk [vmem:[%s4 + $0xa8] sm:$0xff] %vm37, 0.0
      %60 = vst.msk [vmem:[%s4 + $0xb0] sm:$0xff] %vm37, 0.0
      %61 = vst.msk [vmem:[%s4 + $0xb8] sm:$0xff] %vm37, 0.0
      %62 = vst.msk [vmem:[%s4 + $0xc0] sm:$0xff] %vm37, 0.0
      %63 = vst.msk [vmem:[%s4 + $0xc8] sm:$0xff] %vm37, 0.0
      %64 = vst.msk [vmem:[%s4 + $0xd0] sm:$0xff] %vm37, 0.0
      %65 = vst.msk [vmem:[%s4 + $0xd8] sm:$0xff] %vm37, 0.0
      %66 = vst.msk [vmem:[%s4 + $0xe0] sm:$0xff] %vm37, 0.0
      %67 = vst.msk [vmem:[%s4 + $0xe8] sm:$0xff] %vm37, 0.0
      %68 = vst.msk [vmem:[%s4 + $0xf0] sm:$0xff] %vm37, 0.0
      %69 = vst.msk [vmem:[%s4 + $0xf8] sm:$0xff] %vm37, 0.0
      %70 = vst.msk [vmem:[%s5] sm:$0xff] %vm37, 0.0
      %71 = vst.msk [vmem:[%s5 + $0x8] sm:$0xff] %vm37, 0.0
      %72 = vst.msk [vmem:[%s5 + $0x10] sm:$0xff] %vm37, 0.0
      %73 = vst.msk [vmem:[%s5 + $0x18] sm:$0xff] %vm37, 0.0
      %74 = vst.msk [vmem:[%s5 + $0x20] sm:$0xff] %vm37, 0.0
      %75 = vst.msk [vmem:[%s5 + $0x28] sm:$0xff] %vm37, 0.0
      %76 = vst.msk [vmem:[%s5 + $0x30] sm:$0xff] %vm37, 0.0
      %77 = vst.msk [vmem:[%s5 + $0x38] sm:$0xff] %vm37, 0.0
      %78 = vst.msk [vmem:[%s5 + $0x40] sm:$0xff] %vm37, 0.0
      %79 = vst.msk [vmem:[%s5 + $0x48] sm:$0xff] %vm37, 0.0
      %80 = vst.msk [vmem:[%s5 + $0x50] sm:$0xff] %vm37, 0.0
      %81 = vst.msk [vmem:[%s5 + $0x58] sm:$0xff] %vm37, 0.0
      %82 = vst.msk [vmem:[%s5 + $0x60] sm:$0xff] %vm37, 0.0
      %83 = vst.msk [vmem:[%s5 + $0x68] sm:$0xff] %vm37, 0.0
      %84 = vst.msk [vmem:[%s5 + $0x70] sm:$0xff] %vm37, 0.0
      %85 = vst.msk [vmem:[%s5 + $0x78] sm:$0xff] %vm37, 0.0
      %86 = vst.msk [vmem:[%s5 + $0x80] sm:$0xff] %vm37, 0.0
      %87 = vst.msk [vmem:[%s5 + $0x88] sm:$0xff] %vm37, 0.0
      %88 = vst.msk [vmem:[%s5 + $0x90] sm:$0xff] %vm37, 0.0
      %89 = vst.msk [vmem:[%s5 + $0x98] sm:$0xff] %vm37, 0.0
      %90 = vst.msk [vmem:[%s5 + $0xa0] sm:$0xff] %vm37, 0.0
      %91 = vst.msk [vmem:[%s5 + $0xa8] sm:$0xff] %vm37, 0.0
      %92 = vst.msk [vmem:[%s5 + $0xb0] sm:$0xff] %vm37, 0.0
      %93 = vst.msk [vmem:[%s5 + $0xb8] sm:$0xff] %vm37, 0.0
      %94 = vst.msk [vmem:[%s5 + $0xc0] sm:$0xff] %vm37, 0.0
      %95 = vst.msk [vmem:[%s5 + $0xc8] sm:$0xff] %vm37, 0.0
      %96 = vst.msk [vmem:[%s5 + $0xd0] sm:$0xff] %vm37, 0.0
      %97 = vst.msk [vmem:[%s5 + $0xd8] sm:$0xff] %vm37, 0.0
      %98 = vst.msk [vmem:[%s5 + $0xe0] sm:$0xff] %vm37, 0.0
      %99 = vst.msk [vmem:[%s5 + $0xe8] sm:$0xff] %vm37, 0.0
      %100 = vst.msk [vmem:[%s5 + $0xf0] sm:$0xff] %vm37, 0.0
      %101 = vst.msk [vmem:[%s5 + $0xf8] sm:$0xff] %vm37, 0.0
    $region25: #{tpu_custom_call.1} parent=1 // pred_fallthru
      _
    %v102 = vld [vmem:[%s0] sm:$0xff]
    %v103 = vld [vmem:[%s0 + $0x8] sm:$0xff]
    %v104 = vld [vmem:[%s0 + $0x10] sm:$0xff]
    %v105 = vld [vmem:[%s0 + $0x18] sm:$0xff]
    %v106 = vld [vmem:[%s0 + $0x20] sm:$0xff]
    %v107 = vld [vmem:[%s0 + $0x28] sm:$0xff]
    %v108 = vld [vmem:[%s0 + $0x30] sm:$0xff]
    %v109 = vld [vmem:[%s0 + $0x38] sm:$0xff]
    %v110 = vld [vmem:[%s0 + $0x40] sm:$0xff]
    %v111 = vld [vmem:[%s0 + $0x48] sm:$0xff]
    %v112 = vld [vmem:[%s0 + $0x50] sm:$0xff]
    %v113 = vld [vmem:[%s0 + $0x58] sm:$0xff]
    %v114 = vld [vmem:[%s0 + $0x60] sm:$0xff]
    %v115 = vld [vmem:[%s0 + $0x68] sm:$0xff]
    %v116 = vld [vmem:[%s0 + $0x70] sm:$0xff]
    %v117 = vld [vmem:[%s0 + $0x78] sm:$0xff]
    %v118 = vld [vmem:[%s0 + $0x80] sm:$0xff]
    %v119 = vld [vmem:[%s0 + $0x88] sm:$0xff]
    %v120 = vld [vmem:[%s0 + $0x90] sm:$0xff]
    %v121 = vld [vmem:[%s0 + $0x98] sm:$0xff]
    %v122 = vld [vmem:[%s0 + $0xa0] sm:$0xff]
    %v123 = vld [vmem:[%s0 + $0xa8] sm:$0xff]
    %v124 = vld [vmem:[%s0 + $0xb0] sm:$0xff]
    %v125 = vld [vmem:[%s0 + $0xb8] sm:$0xff]
    %v126 = vld [vmem:[%s0 + $0xc0] sm:$0xff]
    %v127 = vld [vmem:[%s0 + $0xc8] sm:$0xff]
    %v128 = vld [vmem:[%s0 + $0xd0] sm:$0xff]
    %v129 = vld [vmem:[%s0 + $0xd8] sm:$0xff]
    %v130 = vld [vmem:[%s0 + $0xe0] sm:$0xff]
    %v131 = vld [vmem:[%s0 + $0xe8] sm:$0xff]
    %v132 = vld [vmem:[%s0 + $0xf0] sm:$0xff]
    %v133 = vld [vmem:[%s0 + $0xf8] sm:$0xff]
    %v134 = vld [vmem:[#allocation2] sm:$0xff]
    %v135 = vld [vmem:[#allocation2 + $0x8] sm:$0xff]
    %v136 = vld [vmem:[#allocation2 + $0x10] sm:$0xff]
    %v137 = vld [vmem:[#allocation2 + $0x18] sm:$0xff]
    %v138 = vld [vmem:[#allocation2 + $0x20] sm:$0xff]
    %v139 = vld [vmem:[#allocation2 + $0x28] sm:$0xff]
    %v140 = vld [vmem:[#allocation2 + $0x30] sm:$0xff]
    %v141 = vld [vmem:[#allocation2 + $0x38] sm:$0xff]
    %v142 = vld [vmem:[#allocation2 + $0x40] sm:$0xff]
    %v143 = vld [vmem:[#allocation2 + $0x48] sm:$0xff]
    %v144 = vld [vmem:[#allocation2 + $0x50] sm:$0xff]
    %v145 = vld [vmem:[#allocation2 + $0x58] sm:$0xff]
    %v146 = vld [vmem:[#allocation2 + $0x60] sm:$0xff]
    %v147 = vld [vmem:[#allocation2 + $0x68] sm:$0xff]
    %v148 = vld [vmem:[#allocation2 + $0x70] sm:$0xff]
    %v149 = vld [vmem:[#allocation2 + $0x78] sm:$0xff]
    %v150 = vld [vmem:[#allocation2 + $0x80] sm:$0xff]
    %v151 = vld [vmem:[#allocation2 + $0x88] sm:$0xff]
    %v152 = vld [vmem:[#allocation2 + $0x90] sm:$0xff]
    %v153 = vld [vmem:[#allocation2 + $0x98] sm:$0xff]
    %v154 = vld [vmem:[#allocation2 + $0xa0] sm:$0xff]
    %v155 = vld [vmem:[#allocation2 + $0xa8] sm:$0xff]
    %v156 = vld [vmem:[#allocation2 + $0xb0] sm:$0xff]
    %v157 = vld [vmem:[#allocation2 + $0xb8] sm:$0xff]
    %v158 = vld [vmem:[#allocation2 + $0xc0] sm:$0xff]
    %v159 = vld [vmem:[#allocation2 + $0xc8] sm:$0xff]
    %v160 = vld [vmem:[#allocation2 + $0xd0] sm:$0xff]
    %v161 = vld [vmem:[#allocation2 + $0xd8] sm:$0xff]
    %v162 = vld [vmem:[#allocation2 + $0xe0] sm:$0xff]
    %v163 = vld [vmem:[#allocation2 + $0xe8] sm:$0xff]
    %v164 = vld [vmem:[#allocation2 + $0xf0] sm:$0xff]
    %v165 = vld [vmem:[#allocation2 + $0xf8] sm:$0xff]
    %166 = vmatprep.subr.mxu0 %v135
    %167 = vmatpush1.msra.mxu0 %v134
    %168 = vmatprep.subr.mxu0 %v137
    %169 = vmatpush1.msra.mxu0 %v136
    %170 = vmatprep.subr.mxu0 %v139
    %171 = vmatpush1.msra.mxu0 %v138
    %172 = vmatprep.subr.mxu0 %v141
    %173 = vmatpush1.msra.mxu0 %v140
    %174 = vmatprep.subr.mxu0 %v143
    %175 = vmatpush1.msra.mxu0 %v142
    %176 = vmatprep.subr.mxu0 %v145
    %177 = vmatpush1.msra.mxu0 %v144
    %178 = vmatprep.subr.mxu0 %v147
    %179 = vmatpush1.msra.mxu0 %v146
    %180 = vmatprep.subr.mxu0 %v149
    %181 = vmatpush1.msra.mxu0 %v148
    %182 = vmatprep.subr.mxu0 %v151
    %183 = vmatpush1.msra.mxu0 %v150
    %184 = vmatprep.subr.mxu0 %v153
    %185 = vmatpush1.msra.mxu0 %v152
    %186 = vmatprep.subr.mxu0 %v155
    %187 = vmatpush1.msra.mxu0 %v154
    %188 = vmatprep.subr.mxu0 %v157
    %189 = vmatpush1.msra.mxu0 %v156
    %190 = vmatprep.subr.mxu0 %v159
    %191 = vmatpush1.msra.mxu0 %v158
    %192 = vmatprep.subr.mxu0 %v161
    %193 = vmatpush1.msra.mxu0 %v160
    %194 = vmatprep.subr.mxu0 %v163
    %195 = vmatpush1.msra.mxu0 %v162
    %196 = vmatprep.subr.mxu0 %v165
    %197 = vmatpush1.msra.mxu0 %v164
    %198 = vmatprep.subr.mxu0 0.0
    %199 = vmatpush1.msra.mxu0 0.0
    %200 = vmatprep.subr.mxu0 0.0
    %201 = vmatpush1.msra.mxu0 0.0
    %202 = vmatprep.subr.mxu0 0.0
    %203 = vmatpush1.msra.mxu0 0.0
    %204 = vmatprep.subr.mxu0 0.0
    %205 = vmatpush1.msra.mxu0 0.0
    %206 = vmatprep.subr.mxu0 0.0
    %207 = vmatpush1.msra.mxu0 0.0
    %208 = vmatprep.subr.mxu0 0.0
    %209 = vmatpush1.msra.mxu0 0.0
    %210 = vmatprep.subr.mxu0 0.0
    %211 = vmatpush1.msra.mxu0 0.0
    %212 = vmatprep.subr.mxu0 0.0
    %213 = vmatpush1.msra.mxu0 0.0
    %214 = vmatprep.subr.mxu0 0.0
    %215 = vmatpush1.msra.mxu0 0.0
    %216 = vmatprep.subr.mxu0 0.0
    %217 = vmatpush1.msra.mxu0 0.0
    %218 = vmatprep.subr.mxu0 0.0
    %219 = vmatpush1.msra.mxu0 0.0
    %220 = vmatprep.subr.mxu0 0.0
    %221 = vmatpush1.msra.mxu0 0.0
    %222 = vmatprep.subr.mxu0 0.0
    %223 = vmatpush1.msra.mxu0 0.0
    %224 = vmatprep.subr.mxu0 0.0
    %225 = vmatpush1.msra.mxu0 0.0
    %226 = vmatprep.subr.mxu0 0.0
    %227 = vmatpush1.msra.mxu0 0.0
    %228 = vmatprep.subr.mxu0 0.0
    %229 = vmatpush1.msra.mxu0 0.0
    %230 = vmatprep.mubr.f32.mxu0 0.0
    %231 = vmatmul.mubr.f32.gmra.mrb[0].mxu0 %v102
    %v232 = vpop.f32.mrb[0].mxu0
    %v233 = vadd.f32 0.0, %v232
    %v234 = vpop.f32.mrb[0].mxu0
    %v235 = vadd.f32 0.0, %v234
    %236 = vmatprep.mubr.f32.mxu0 0.0
    %237 = vmatmul.mubr.f32.gmra.mrb[0].mxu0 %v103
    %v238 = vpop.f32.mrb[0].mxu0
    %v239 = vadd.f32 0.0, %v238
    %v240 = vpop.f32.mrb[0].mxu0
    %v241 = vadd.f32 0.0, %v240
    %242 = vmatprep.mubr.f32.mxu0 0.0
    %243 = vmatmul.mubr.f32.gmra.mrb[0].mxu0 %v104
    %v244 = vpop.f32.mrb[0].mxu0
    %v245 = vadd.f32 0.0, %v244
    %v246 = vpop.f32.mrb[0].mxu0
    %v247 = vadd.f32 0.0, %v246
    %248 = vmatprep.mubr.f32.mxu0 0.0
    %249 = vmatmul.mubr.f32.gmra.mrb[0].mxu0 %v105
    %v250 = vpop.f32.mrb[0].mxu0
    %v251 = vadd.f32 0.0, %v250
    %v252 = vpop.f32.mrb[0].mxu0
    %v253 = vadd.f32 0.0, %v252
    %254 = vmatprep.mubr.f32.mxu0 0.0
    %255 = vmatmul.mubr.f32.gmra.mrb[0].mxu0 %v106
    %v256 = vpop.f32.mrb[0].mxu0
    %v257 = vadd.f32 0.0, %v256
    %v258 = vpop.f32.mrb[0].mxu0
    %v259 = vadd.f32 0.0, %v258
    %260 = vmatprep.mubr.f32.mxu0 0.0
    %261 = vmatmul.mubr.f32.gmra.mrb[0].mxu0 %v107
    %v262 = vpop.f32.mrb[0].mxu0
    %v263 = vadd.f32 0.0, %v262
    %v264 = vpop.f32.mrb[0].mxu0
    %v265 = vadd.f32 0.0, %v264
    %266 = vmatprep.mubr.f32.mxu0 0.0
    %267 = vmatmul.mubr.f32.gmra.mrb[0].mxu0 %v108
    %v268 = vpop.f32.mrb[0].mxu0
    %v269 = vadd.f32 0.0, %v268
    %v270 = vpop.f32.mrb[0].mxu0
    %v271 = vadd.f32 0.0, %v270
    %272 = vmatprep.mubr.f32.mxu0 0.0
    %273 = vmatmul.mubr.f32.gmra.mrb[0].mxu0 %v109
    %v274 = vpop.f32.mrb[0].mxu0
    %v275 = vadd.f32 0.0, %v274
    %v276 = vpop.f32.mrb[0].mxu0
    %v277 = vadd.f32 0.0, %v276
    %278 = vmatprep.mubr.f32.mxu0 0.0
    %279 = vmatmul.mubr.f32.gmra.mrb[0].mxu0 %v110
    %v280 = vpop.f32.mrb[0].mxu0
    %v281 = vadd.f32 0.0, %v280
    %v282 = vpop.f32.mrb[0].mxu0
    %v283 = vadd.f32 0.0, %v282
    %284 = vmatprep.mubr.f32.mxu0 0.0
    %285 = vmatmul.mubr.f32.gmra.mrb[0].mxu0 %v111
    %v286 = vpop.f32.mrb[0].mxu0
    %v287 = vadd.f32 0.0, %v286
    %v288 = vpop.f32.mrb[0].mxu0
    %v289 = vadd.f32 0.0, %v288
    %290 = vmatprep.mubr.f32.mxu0 0.0
    %291 = vmatmul.mubr.f32.gmra.mrb[0].mxu0 %v112
    %v292 = vpop.f32.mrb[0].mxu0
    %v293 = vadd.f32 0.0, %v292
    %v294 = vpop.f32.mrb[0].mxu0
    %v295 = vadd.f32 0.0, %v294
    %296 = vmatprep.mubr.f32.mxu0 0.0
    %297 = vmatmul.mubr.f32.gmra.mrb[0].mxu0 %v113
    %v298 = vpop.f32.mrb[0].mxu0
    %v299 = vadd.f32 0.0, %v298
    %v300 = vpop.f32.mrb[0].mxu0
    %v301 = vadd.f32 0.0, %v300
    %302 = vmatprep.mubr.f32.mxu0 0.0
    %303 = vmatmul.mubr.f32.gmra.mrb[0].mxu0 %v114
    %v304 = vpop.f32.mrb[0].mxu0
    %v305 = vadd.f32 0.0, %v304
    %v306 = vpop.f32.mrb[0].mxu0
    %v307 = vadd.f32 0.0, %v306
    %308 = vmatprep.mubr.f32.mxu0 0.0
    %309 = vmatmul.mubr.f32.gmra.mrb[0].mxu0 %v115
    %v310 = vpop.f32.mrb[0].mxu0
    %v311 = vadd.f32 0.0, %v310
    %v312 = vpop.f32.mrb[0].mxu0
    %v313 = vadd.f32 0.0, %v312
    %314 = vmatprep.mubr.f32.mxu0 0.0
    %315 = vmatmul.mubr.f32.gmra.mrb[0].mxu0 %v116
    %v316 = vpop.f32.mrb[0].mxu0
    %v317 = vadd.f32 0.0, %v316
    %v318 = vpop.f32.mrb[0].mxu0
    %v319 = vadd.f32 0.0, %v318
    %320 = vmatprep.mubr.f32.mxu0 0.0
    %321 = vmatmul.mubr.f32.gmra.mrb[0].mxu0 %v117
    %v322 = vpop.f32.mrb[0].mxu0
    %v323 = vadd.f32 0.0, %v322
    %v324 = vpop.f32.mrb[0].mxu0
    %v325 = vadd.f32 0.0, %v324
    %326 = vmatprep.mubr.f32.mxu0 0.0
    %327 = vmatmul.mubr.f32.gmra.mrb[0].mxu0 %v118
    %v328 = vpop.f32.mrb[0].mxu0
    %v329 = vadd.f32 0.0, %v328
    %v330 = vpop.f32.mrb[0].mxu0
    %v331 = vadd.f32 0.0, %v330
    %332 = vmatprep.mubr.f32.mxu0 0.0
    %333 = vmatmul.mubr.f32.gmra.mrb[0].mxu0 %v119
    %v334 = vpop.f32.mrb[0].mxu0
    %v335 = vadd.f32 0.0, %v334
    %v336 = vpop.f32.mrb[0].mxu0
    %v337 = vadd.f32 0.0, %v336
    %338 = vmatprep.mubr.f32.mxu0 0.0
    %339 = vmatmul.mubr.f32.gmra.mrb[0].mxu0 %v120
    %v340 = vpop.f32.mrb[0].mxu0
    %v341 = vadd.f32 0.0, %v340
    %v342 = vpop.f32.mrb[0].mxu0
    %v343 = vadd.f32 0.0, %v342
    %344 = vmatprep.mubr.f32.mxu0 0.0
    %345 = vmatmul.mubr.f32.gmra.mrb[0].mxu0 %v121
    %v346 = vpop.f32.mrb[0].mxu0
    %v347 = vadd.f32 0.0, %v346
    %v348 = vpop.f32.mrb[0].mxu0
    %v349 = vadd.f32 0.0, %v348
    %350 = vmatprep.mubr.f32.mxu0 0.0
    %351 = vmatmul.mubr.f32.gmra.mrb[0].mxu0 %v122
    %v352 = vpop.f32.mrb[0].mxu0
    %v353 = vadd.f32 0.0, %v352
    %v354 = vpop.f32.mrb[0].mxu0
    %v355 = vadd.f32 0.0, %v354
    %356 = vmatprep.mubr.f32.mxu0 0.0
    %357 = vmatmul.mubr.f32.gmra.mrb[0].mxu0 %v123
    %v358 = vpop.f32.mrb[0].mxu0
    %v359 = vadd.f32 0.0, %v358
    %v360 = vpop.f32.mrb[0].mxu0
    %v361 = vadd.f32 0.0, %v360
    %362 = vmatprep.mubr.f32.mxu0 0.0
    %363 = vmatmul.mubr.f32.gmra.mrb[0].mxu0 %v124
    %v364 = vpop.f32.mrb[0].mxu0
    %v365 = vadd.f32 0.0, %v364
    %v366 = vpop.f32.mrb[0].mxu0
    %v367 = vadd.f32 0.0, %v366
    %368 = vmatprep.mubr.f32.mxu0 0.0
    %369 = vmatmul.mubr.f32.gmra.mrb[0].mxu0 %v125
    %v370 = vpop.f32.mrb[0].mxu0
    %v371 = vadd.f32 0.0, %v370
    %v372 = vpop.f32.mrb[0].mxu0
    %v373 = vadd.f32 0.0, %v372
    %374 = vmatprep.mubr.f32.mxu0 0.0
    %375 = vmatmul.mubr.f32.gmra.mrb[0].mxu0 %v126
    %v376 = vpop.f32.mrb[0].mxu0
    %v377 = vadd.f32 0.0, %v376
    %v378 = vpop.f32.mrb[0].mxu0
    %v379 = vadd.f32 0.0, %v378
    %380 = vmatprep.mubr.f32.mxu0 0.0
    %381 = vmatmul.mubr.f32.gmra.mrb[0].mxu0 %v127
    %v382 = vpop.f32.mrb[0].mxu0
    %v383 = vadd.f32 0.0, %v382
    %v384 = vpop.f32.mrb[0].mxu0
    %v385 = vadd.f32 0.0, %v384
    %386 = vmatprep.mubr.f32.mxu0 0.0
    %387 = vmatmul.mubr.f32.gmra.mrb[0].mxu0 %v128
    %v388 = vpop.f32.mrb[0].mxu0
    %v389 = vadd.f32 0.0, %v388
    %v390 = vpop.f32.mrb[0].mxu0
    %v391 = vadd.f32 0.0, %v390
    %392 = vmatprep.mubr.f32.mxu0 0.0
    %393 = vmatmul.mubr.f32.gmra.mrb[0].mxu0 %v129
    %v394 = vpop.f32.mrb[0].mxu0
    %v395 = vadd.f32 0.0, %v394
    %v396 = vpop.f32.mrb[0].mxu0
    %v397 = vadd.f32 0.0, %v396
    %398 = vmatprep.mubr.f32.mxu0 0.0
    %399 = vmatmul.mubr.f32.gmra.mrb[0].mxu0 %v130
    %v400 = vpop.f32.mrb[0].mxu0
    %v401 = vadd.f32 0.0, %v400
    %v402 = vpop.f32.mrb[0].mxu0
    %v403 = vadd.f32 0.0, %v402
    %404 = vmatprep.mubr.f32.mxu0 0.0
    %405 = vmatmul.mubr.f32.gmra.mrb[0].mxu0 %v131
    %v406 = vpop.f32.mrb[0].mxu0
    %v407 = vadd.f32 0.0, %v406
    %v408 = vpop.f32.mrb[0].mxu0
    %v409 = vadd.f32 0.0, %v408
    %410 = vmatprep.mubr.f32.mxu0 0.0
    %411 = vmatmul.mubr.f32.gmra.mrb[0].mxu0 %v132
    %v412 = vpop.f32.mrb[0].mxu0
    %v413 = vadd.f32 0.0, %v412
    %v414 = vpop.f32.mrb[0].mxu0
    %v415 = vadd.f32 0.0, %v414
    %416 = vmatprep.mubr.f32.mxu0 0.0
    %417 = vmatmul.mubr.f32.gmra.mrb[0].mxu0 %v133
    %v418 = vpop.f32.mrb[0].mxu0
    %v419 = vadd.f32 0.0, %v418
    %v420 = vpop.f32.mrb[0].mxu0
    %v421 = vadd.f32 0.0, %v420
    %422 = vdwg.mxu0
    %v423 = vld [vmem:[%s2] sm:$0xff]
    %v424 = vld [vmem:[%s2 + $0x8] sm:$0xff]
    %v425 = vld [vmem:[%s2 + $0x10] sm:$0xff]
    %v426 = vld [vmem:[%s2 + $0x18] sm:$0xff]
    %v427 = vld [vmem:[%s2 + $0x20] sm:$0xff]
    %v428 = vld [vmem:[%s2 + $0x28] sm:$0xff]
    %v429 = vld [vmem:[%s2 + $0x30] sm:$0xff]
    %v430 = vld [vmem:[%s2 + $0x38] sm:$0xff]
    %v431 = vld [vmem:[%s2 + $0x40] sm:$0xff]
    %v432 = vld [vmem:[%s2 + $0x48] sm:$0xff]
    %v433 = vld [vmem:[%s2 + $0x50] sm:$0xff]
    %v434 = vld [vmem:[%s2 + $0x58] sm:$0xff]
    %v435 = vld [vmem:[%s2 + $0x60] sm:$0xff]
    %v436 = vld [vmem:[%s2 + $0x68] sm:$0xff]
    %v437 = vld [vmem:[%s2 + $0x70] sm:$0xff]
    %v438 = vld [vmem:[%s2 + $0x78] sm:$0xff]
    %v439 = vld [vmem:[%s2 + $0x80] sm:$0xff]
    %v440 = vld [vmem:[%s2 + $0x88] sm:$0xff]
    %v441 = vld [vmem:[%s2 + $0x90] sm:$0xff]
    %v442 = vld [vmem:[%s2 + $0x98] sm:$0xff]
    %v443 = vld [vmem:[%s2 + $0xa0] sm:$0xff]
    %v444 = vld [vmem:[%s2 + $0xa8] sm:$0xff]
    %v445 = vld [vmem:[%s2 + $0xb0] sm:$0xff]
    %v446 = vld [vmem:[%s2 + $0xb8] sm:$0xff]
    %v447 = vld [vmem:[%s2 + $0xc0] sm:$0xff]
    %v448 = vld [vmem:[%s2 + $0xc8] sm:$0xff]
    %v449 = vld [vmem:[%s2 + $0xd0] sm:$0xff]
    %v450 = vld [vmem:[%s2 + $0xd8] sm:$0xff]
    %v451 = vld [vmem:[%s2 + $0xe0] sm:$0xff]
    %v452 = vld [vmem:[%s2 + $0xe8] sm:$0xff]
    %v453 = vld [vmem:[%s2 + $0xf0] sm:$0xff]
    %v454 = vld [vmem:[%s2 + $0xf8] sm:$0xff]
    %v455 = vld [vmem:[%s3] sm:$0x3]
    %456 = vset.pattern.permute.xlu0 0
    %457 = vperm.xlu0 %456, %v423
    %v458 = vpop.permute.xlu0 %457
    %459 = vset.pattern.permute.xlu0 0
    %460 = vperm.xlu0 %459, %v424
    %v461 = vpop.permute.xlu0 %460
    %462 = vset.pattern.permute.xlu0 0
    %463 = vperm.xlu0 %462, %v425
    %v464 = vpop.permute.xlu0 %463
    %465 = vset.pattern.permute.xlu0 0
    %466 = vperm.xlu0 %465, %v426
    %v467 = vpop.permute.xlu0 %466
    %468 = vset.pattern.permute.xlu0 0
    %469 = vperm.xlu0 %468, %v427
    %v470 = vpop.permute.xlu0 %469
    %471 = vset.pattern.permute.xlu0 0
    %472 = vperm.xlu0 %471, %v428
    %v473 = vpop.permute.xlu0 %472
    %474 = vset.pattern.permute.xlu0 0
    %475 = vperm.xlu0 %474, %v429
    %v476 = vpop.permute.xlu0 %475
    %477 = vset.pattern.permute.xlu0 0
    %478 = vperm.xlu0 %477, %v430
    %v479 = vpop.permute.xlu0 %478
    %480 = vset.pattern.permute.xlu0 0
    %481 = vperm.xlu0 %480, %v431
    %v482 = vpop.permute.xlu0 %481
    %483 = vset.pattern.permute.xlu0 0
    %484 = vperm.xlu0 %483, %v432
    %v485 = vpop.permute.xlu0 %484
    %486 = vset.pattern.permute.xlu0 0
    %487 = vperm.xlu0 %486, %v433
    %v488 = vpop.permute.xlu0 %487
    %489 = vset.pattern.permute.xlu0 0
    %490 = vperm.xlu0 %489, %v434
    %v491 = vpop.permute.xlu0 %490
    %492 = vset.pattern.permute.xlu0 0
    %493 = vperm.xlu0 %492, %v435
    %v494 = vpop.permute.xlu0 %493
    %495 = vset.pattern.permute.xlu0 0
    %496 = vperm.xlu0 %495, %v436
    %v497 = vpop.permute.xlu0 %496
    %498 = vset.pattern.permute.xlu0 0
    %499 = vperm.xlu0 %498, %v437
    %v500 = vpop.permute.xlu0 %499
    %501 = vset.pattern.permute.xlu0 0
    %502 = vperm.xlu0 %501, %v438
    %v503 = vpop.permute.xlu0 %502
    %504 = vset.pattern.permute.xlu0 0
    %505 = vperm.xlu0 %504, %v439
    %v506 = vpop.permute.xlu0 %505
    %507 = vset.pattern.permute.xlu0 0
    %508 = vperm.xlu0 %507, %v440
    %v509 = vpop.permute.xlu0 %508
    %510 = vset.pattern.permute.xlu0 0
    %511 = vperm.xlu0 %510, %v441
    %v512 = vpop.permute.xlu0 %511
    %513 = vset.pattern.permute.xlu0 0
    %514 = vperm.xlu0 %513, %v442
    %v515 = vpop.permute.xlu0 %514
    %516 = vset.pattern.permute.xlu0 0
    %517 = vperm.xlu0 %516, %v443
    %v518 = vpop.permute.xlu0 %517
    %519 = vset.pattern.permute.xlu0 0
    %520 = vperm.xlu0 %519, %v444
    %v521 = vpop.permute.xlu0 %520
    %522 = vset.pattern.permute.xlu0 0
    %523 = vperm.xlu0 %522, %v445
    %v524 = vpop.permute.xlu0 %523
    %525 = vset.pattern.permute.xlu0 0
    %526 = vperm.xlu0 %525, %v446
    %v527 = vpop.permute.xlu0 %526
    %528 = vset.pattern.permute.xlu0 0
    %529 = vperm.xlu0 %528, %v447
    %v530 = vpop.permute.xlu0 %529
    %531 = vset.pattern.permute.xlu0 0
    %532 = vperm.xlu0 %531, %v448
    %v533 = vpop.permute.xlu0 %532
    %534 = vset.pattern.permute.xlu0 0
    %535 = vperm.xlu0 %534, %v449
    %v536 = vpop.permute.xlu0 %535
    %537 = vset.pattern.permute.xlu0 0
    %538 = vperm.xlu0 %537, %v450
    %v539 = vpop.permute.xlu0 %538
    %540 = vset.pattern.permute.xlu0 0
    %541 = vperm.xlu0 %540, %v451
    %v542 = vpop.permute.xlu0 %541
    %543 = vset.pattern.permute.xlu0 0
    %544 = vperm.xlu0 %543, %v452
    %v545 = vpop.permute.xlu0 %544
    %546 = vset.pattern.permute.xlu0 0
    %547 = vperm.xlu0 %546, %v453
    %v548 = vpop.permute.xlu0 %547
    %549 = vset.pattern.permute.xlu0 0
    %550 = vperm.xlu0 %549, %v454
    %v551 = vpop.permute.xlu0 %550
    %v552 = vlaneseq
    %v553 = vshrl.u32 %v552, 7
    %v554 = vsub.s32 0, %v553
    %v555 = vrot.slane %v455, %v554
    %v556 = vlaneseq
    %v557 = vshrl.u32 %v556, 7
    %v558 = vsub.s32 1, %v557
    %v559 = vrot.slane %v455, %v558
    %vm560 = vcmp.eq.s32.totalorder %v458, %v555
    %vm561 = vcmp.eq.s32.totalorder %v458, %v559
    %vm562 = vcmp.eq.s32.totalorder %v461, %v555
    %vm563 = vcmp.eq.s32.totalorder %v461, %v559
    %vm564 = vcmp.eq.s32.totalorder %v464, %v555
    %vm565 = vcmp.eq.s32.totalorder %v464, %v559
    %vm566 = vcmp.eq.s32.totalorder %v467, %v555
    %vm567 = vcmp.eq.s32.totalorder %v467, %v559
    %vm568 = vcmp.eq.s32.totalorder %v470, %v555
    %vm569 = vcmp.eq.s32.totalorder %v470, %v559
    %vm570 = vcmp.eq.s32.totalorder %v473, %v555
    %vm571 = vcmp.eq.s32.totalorder %v473, %v559
    %vm572 = vcmp.eq.s32.totalorder %v476, %v555
    %vm573 = vcmp.eq.s32.totalorder %v476, %v559
    %vm574 = vcmp.eq.s32.totalorder %v479, %v555
    %vm575 = vcmp.eq.s32.totalorder %v479, %v559
    %vm576 = vcmp.eq.s32.totalorder %v482, %v555
    %vm577 = vcmp.eq.s32.totalorder %v482, %v559
    %vm578 = vcmp.eq.s32.totalorder %v485, %v555
    %vm579 = vcmp.eq.s32.totalorder %v485, %v559
    %vm580 = vcmp.eq.s32.totalorder %v488, %v555
    %vm581 = vcmp.eq.s32.totalorder %v488, %v559
    %vm582 = vcmp.eq.s32.totalorder %v491, %v555
    %vm583 = vcmp.eq.s32.totalorder %v491, %v559
    %vm584 = vcmp.eq.s32.totalorder %v494, %v555
    %vm585 = vcmp.eq.s32.totalorder %v494, %v559
    %vm586 = vcmp.eq.s32.totalorder %v497, %v555
    %vm587 = vcmp.eq.s32.totalorder %v497, %v559
    %vm588 = vcmp.eq.s32.totalorder %v500, %v555
    %vm589 = vcmp.eq.s32.totalorder %v500, %v559
    %vm590 = vcmp.eq.s32.totalorder %v503, %v555
    %vm591 = vcmp.eq.s32.totalorder %v503, %v559
    %vm592 = vcmp.eq.s32.totalorder %v506, %v555
    %vm593 = vcmp.eq.s32.totalorder %v506, %v559
    %vm594 = vcmp.eq.s32.totalorder %v509, %v555
    %vm595 = vcmp.eq.s32.totalorder %v509, %v559
    %vm596 = vcmp.eq.s32.totalorder %v512, %v555
    %vm597 = vcmp.eq.s32.totalorder %v512, %v559
    %vm598 = vcmp.eq.s32.totalorder %v515, %v555
    %vm599 = vcmp.eq.s32.totalorder %v515, %v559
    %vm600 = vcmp.eq.s32.totalorder %v518, %v555
    %vm601 = vcmp.eq.s32.totalorder %v518, %v559
    %vm602 = vcmp.eq.s32.totalorder %v521, %v555
    %vm603 = vcmp.eq.s32.totalorder %v521, %v559
    %vm604 = vcmp.eq.s32.totalorder %v524, %v555
    %vm605 = vcmp.eq.s32.totalorder %v524, %v559
    %vm606 = vcmp.eq.s32.totalorder %v527, %v555
    %vm607 = vcmp.eq.s32.totalorder %v527, %v559
    %vm608 = vcmp.eq.s32.totalorder %v530, %v555
    %vm609 = vcmp.eq.s32.totalorder %v530, %v559
    %vm610 = vcmp.eq.s32.totalorder %v533, %v555
    %vm611 = vcmp.eq.s32.totalorder %v533, %v559
    %vm612 = vcmp.eq.s32.totalorder %v536, %v555
    %vm613 = vcmp.eq.s32.totalorder %v536, %v559
    %vm614 = vcmp.eq.s32.totalorder %v539, %v555
    %vm615 = vcmp.eq.s32.totalorder %v539, %v559
    %vm616 = vcmp.eq.s32.totalorder %v542, %v555
    %vm617 = vcmp.eq.s32.totalorder %v542, %v559
    %vm618 = vcmp.eq.s32.totalorder %v545, %v555
    %vm619 = vcmp.eq.s32.totalorder %v545, %v559
    %vm620 = vcmp.eq.s32.totalorder %v548, %v555
    %vm621 = vcmp.eq.s32.totalorder %v548, %v559
    %vm622 = vcmp.eq.s32.totalorder %v551, %v555
    %vm623 = vcmp.eq.s32.totalorder %v551, %v559
    %v624 = vmul.f32 %v233, 14.285714
    %v625 = vmul.f32 %v235, 14.285714
    %v626 = vmul.f32 %v239, 14.285714
    %v627 = vmul.f32 %v241, 14.285714
    %v628 = vmul.f32 %v245, 14.285714
    %v629 = vmul.f32 %v247, 14.285714
    %v630 = vmul.f32 %v251, 14.285714
    %v631 = vmul.f32 %v253, 14.285714
    %v632 = vmul.f32 %v257, 14.285714
    %v633 = vmul.f32 %v259, 14.285714
    %v634 = vmul.f32 %v263, 14.285714
    %v635 = vmul.f32 %v265, 14.285714
    %v636 = vmul.f32 %v269, 14.285714
    %v637 = vmul.f32 %v271, 14.285714
    %v638 = vmul.f32 %v275, 14.285714
    %v639 = vmul.f32 %v277, 14.285714
    %v640 = vmul.f32 %v281, 14.285714
    %v641 = vmul.f32 %v283, 14.285714
    %v642 = vmul.f32 %v287, 14.285714
    %v643 = vmul.f32 %v289, 14.285714
    %v644 = vmul.f32 %v293, 14.285714
    %v645 = vmul.f32 %v295, 14.285714
    %v646 = vmul.f32 %v299, 14.285714
    %v647 = vmul.f32 %v301, 14.285714
    %v648 = vmul.f32 %v305, 14.285714
    %v649 = vmul.f32 %v307, 14.285714
    %v650 = vmul.f32 %v311, 14.285714
    %v651 = vmul.f32 %v313, 14.285714
    %v652 = vmul.f32 %v317, 14.285714
    %v653 = vmul.f32 %v319, 14.285714
    %v654 = vmul.f32 %v323, 14.285714
    %v655 = vmul.f32 %v325, 14.285714
    %v656 = vmul.f32 %v329, 14.285714
    %v657 = vmul.f32 %v331, 14.285714
    %v658 = vmul.f32 %v335, 14.285714
    %v659 = vmul.f32 %v337, 14.285714
    %v660 = vmul.f32 %v341, 14.285714
    %v661 = vmul.f32 %v343, 14.285714
    %v662 = vmul.f32 %v347, 14.285714
    %v663 = vmul.f32 %v349, 14.285714
    %v664 = vmul.f32 %v353, 14.285714
    %v665 = vmul.f32 %v355, 14.285714
    %v666 = vmul.f32 %v359, 14.285714
    %v667 = vmul.f32 %v361, 14.285714
    %v668 = vmul.f32 %v365, 14.285714
    %v669 = vmul.f32 %v367, 14.285714
    %v670 = vmul.f32 %v371, 14.285714
    %v671 = vmul.f32 %v373, 14.285714
    %v672 = vmul.f32 %v377, 14.285714
    %v673 = vmul.f32 %v379, 14.285714
    %v674 = vmul.f32 %v383, 14.285714
    %v675 = vmul.f32 %v385, 14.285714
    %v676 = vmul.f32 %v389, 14.285714
    %v677 = vmul.f32 %v391, 14.285714
    %v678 = vmul.f32 %v395, 14.285714
    %v679 = vmul.f32 %v397, 14.285714
    %v680 = vmul.f32 %v401, 14.285714
    %v681 = vmul.f32 %v403, 14.285714
    %v682 = vmul.f32 %v407, 14.285714
    %v683 = vmul.f32 %v409, 14.285714
    %v684 = vmul.f32 %v413, 14.285714
    %v685 = vmul.f32 %v415, 14.285714
    %v686 = vmul.f32 %v419, 14.285714
    %v687 = vmul.f32 %v421, 14.285714
    %v688 = vsub.f32 %v624, 14.285713
    %v689 = vsub.f32 %v625, 14.285713
    %v690 = vsub.f32 %v626, 14.285713
    %v691 = vsub.f32 %v627, 14.285713
    %v692 = vsub.f32 %v628, 14.285713
    %v693 = vsub.f32 %v629, 14.285713
    %v694 = vsub.f32 %v630, 14.285713
    %v695 = vsub.f32 %v631, 14.285713
    %v696 = vsub.f32 %v632, 14.285713
    %v697 = vsub.f32 %v633, 14.285713
    %v698 = vsub.f32 %v634, 14.285713
    %v699 = vsub.f32 %v635, 14.285713
    %v700 = vsub.f32 %v636, 14.285713
    %v701 = vsub.f32 %v637, 14.285713
    %v702 = vsub.f32 %v638, 14.285713
    %v703 = vsub.f32 %v639, 14.285713
    %v704 = vsub.f32 %v640, 14.285713
    %v705 = vsub.f32 %v641, 14.285713
    %v706 = vsub.f32 %v642, 14.285713
    %v707 = vsub.f32 %v643, 14.285713
    %v708 = vsub.f32 %v644, 14.285713
    %v709 = vsub.f32 %v645, 14.285713
    %v710 = vsub.f32 %v646, 14.285713
    %v711 = vsub.f32 %v647, 14.285713
    %v712 = vsub.f32 %v648, 14.285713
    %v713 = vsub.f32 %v649, 14.285713
    %v714 = vsub.f32 %v650, 14.285713
    %v715 = vsub.f32 %v651, 14.285713
    %v716 = vsub.f32 %v652, 14.285713
    %v717 = vsub.f32 %v653, 14.285713
    %v718 = vsub.f32 %v654, 14.285713
    %v719 = vsub.f32 %v655, 14.285713
    %v720 = vsub.f32 %v656, 14.285713
    %v721 = vsub.f32 %v657, 14.285713
    %v722 = vsub.f32 %v658, 14.285713
    %v723 = vsub.f32 %v659, 14.285713
    %v724 = vsub.f32 %v660, 14.285713
    %v725 = vsub.f32 %v661, 14.285713
    %v726 = vsub.f32 %v662, 14.285713
    %v727 = vsub.f32 %v663, 14.285713
    %v728 = vsub.f32 %v664, 14.285713
    %v729 = vsub.f32 %v665, 14.285713
    %v730 = vsub.f32 %v666, 14.285713
    %v731 = vsub.f32 %v667, 14.285713
    %v732 = vsub.f32 %v668, 14.285713
    %v733 = vsub.f32 %v669, 14.285713
    %v734 = vsub.f32 %v670, 14.285713
    %v735 = vsub.f32 %v671, 14.285713
    %v736 = vsub.f32 %v672, 14.285713
    %v737 = vsub.f32 %v673, 14.285713
    %v738 = vsub.f32 %v674, 14.285713
    %v739 = vsub.f32 %v675, 14.285713
    %v740 = vsub.f32 %v676, 14.285713
    %v741 = vsub.f32 %v677, 14.285713
    %v742 = vsub.f32 %v678, 14.285713
    %v743 = vsub.f32 %v679, 14.285713
    %v744 = vsub.f32 %v680, 14.285713
    %v745 = vsub.f32 %v681, 14.285713
    %v746 = vsub.f32 %v682, 14.285713
    %v747 = vsub.f32 %v683, 14.285713
    %v748 = vsub.f32 %v684, 14.285713
    %v749 = vsub.f32 %v685, 14.285713
    %v750 = vsub.f32 %v686, 14.285713
    %v751 = vsub.f32 %v687, 14.285713
    %v752 = vsub.f32 %v688, 1.4285715
    %v753 = vsub.f32 %v689, 1.4285715
    %v754 = vsub.f32 %v690, 1.4285715
    %v755 = vsub.f32 %v691, 1.4285715
    %v756 = vsub.f32 %v692, 1.4285715
    %v757 = vsub.f32 %v693, 1.4285715
    %v758 = vsub.f32 %v694, 1.4285715
    %v759 = vsub.f32 %v695, 1.4285715
    %v760 = vsub.f32 %v696, 1.4285715
    %v761 = vsub.f32 %v697, 1.4285715
    %v762 = vsub.f32 %v698, 1.4285715
    %v763 = vsub.f32 %v699, 1.4285715
    %v764 = vsub.f32 %v700, 1.4285715
    %v765 = vsub.f32 %v701, 1.4285715
    %v766 = vsub.f32 %v702, 1.4285715
    %v767 = vsub.f32 %v703, 1.4285715
    %v768 = vsub.f32 %v704, 1.4285715
    %v769 = vsub.f32 %v705, 1.4285715
    %v770 = vsub.f32 %v706, 1.4285715
    %v771 = vsub.f32 %v707, 1.4285715
    %v772 = vsub.f32 %v708, 1.4285715
    %v773 = vsub.f32 %v709, 1.4285715
    %v774 = vsub.f32 %v710, 1.4285715
    %v775 = vsub.f32 %v711, 1.4285715
    %v776 = vsub.f32 %v712, 1.4285715
    %v777 = vsub.f32 %v713, 1.4285715
    %v778 = vsub.f32 %v714, 1.4285715
    %v779 = vsub.f32 %v715, 1.4285715
    %v780 = vsub.f32 %v716, 1.4285715
    %v781 = vsub.f32 %v717, 1.4285715
    %v782 = vsub.f32 %v718, 1.4285715
    %v783 = vsub.f32 %v719, 1.4285715
    %v784 = vsub.f32 %v720, 1.4285715
    %v785 = vsub.f32 %v721, 1.4285715
    %v786 = vsub.f32 %v722, 1.4285715
    %v787 = vsub.f32 %v723, 1.4285715
    %v788 = vsub.f32 %v724, 1.4285715
    %v789 = vsub.f32 %v725, 1.4285715
    %v790 = vsub.f32 %v726, 1.4285715
    %v791 = vsub.f32 %v727, 1.4285715
    %v792 = vsub.f32 %v728, 1.4285715
    %v793 = vsub.f32 %v729, 1.4285715
    %v794 = vsub.f32 %v730, 1.4285715
    %v795 = vsub.f32 %v731, 1.4285715
    %v796 = vsub.f32 %v732, 1.4285715
    %v797 = vsub.f32 %v733, 1.4285715
    %v798 = vsub.f32 %v734, 1.4285715
    %v799 = vsub.f32 %v735, 1.4285715
    %v800 = vsub.f32 %v736, 1.4285715
    %v801 = vsub.f32 %v737, 1.4285715
    %v802 = vsub.f32 %v738, 1.4285715
    %v803 = vsub.f32 %v739, 1.4285715
    %v804 = vsub.f32 %v740, 1.4285715
    %v805 = vsub.f32 %v741, 1.4285715
    %v806 = vsub.f32 %v742, 1.4285715
    %v807 = vsub.f32 %v743, 1.4285715
    %v808 = vsub.f32 %v744, 1.4285715
    %v809 = vsub.f32 %v745, 1.4285715
    %v810 = vsub.f32 %v746, 1.4285715
    %v811 = vsub.f32 %v747, 1.4285715
    %v812 = vsub.f32 %v748, 1.4285715
    %v813 = vsub.f32 %v749, 1.4285715
    %v814 = vsub.f32 %v750, 1.4285715
    %v815 = vsub.f32 %v751, 1.4285715
    %v816 = vsel %vm560, %v752, %v688
    %v817 = vsel %vm561, %v753, %v689
    %v818 = vsel %vm562, %v754, %v690
    %v819 = vsel %vm563, %v755, %v691
    %v820 = vsel %vm564, %v756, %v692
    %v821 = vsel %vm565, %v757, %v693
    %v822 = vsel %vm566, %v758, %v694
    %v823 = vsel %vm567, %v759, %v695
    %v824 = vsel %vm568, %v760, %v696
    %v825 = vsel %vm569, %v761, %v697
    %v826 = vsel %vm570, %v762, %v698
    %v827 = vsel %vm571, %v763, %v699
    %v828 = vsel %vm572, %v764, %v700
    %v829 = vsel %vm573, %v765, %v701
    %v830 = vsel %vm574, %v766, %v702
    %v831 = vsel %vm575, %v767, %v703
    %v832 = vsel %vm576, %v768, %v704
    %v833 = vsel %vm577, %v769, %v705
    %v834 = vsel %vm578, %v770, %v706
    %v835 = vsel %vm579, %v771, %v707
    %v836 = vsel %vm580, %v772, %v708
    %v837 = vsel %vm581, %v773, %v709
    %v838 = vsel %vm582, %v774, %v710
    %v839 = vsel %vm583, %v775, %v711
    %v840 = vsel %vm584, %v776, %v712
    %v841 = vsel %vm585, %v777, %v713
    %v842 = vsel %vm586, %v778, %v714
    %v843 = vsel %vm587, %v779, %v715
    %v844 = vsel %vm588, %v780, %v716
    %v845 = vsel %vm589, %v781, %v717
    %v846 = vsel %vm590, %v782, %v718
    %v847 = vsel %vm591, %v783, %v719
    %v848 = vsel %vm592, %v784, %v720
    %v849 = vsel %vm593, %v785, %v721
    %v850 = vsel %vm594, %v786, %v722
    %v851 = vsel %vm595, %v787, %v723
    %v852 = vsel %vm596, %v788, %v724
    %v853 = vsel %vm597, %v789, %v725
    %v854 = vsel %vm598, %v790, %v726
    %v855 = vsel %vm599, %v791, %v727
    %v856 = vsel %vm600, %v792, %v728
    %v857 = vsel %vm601, %v793, %v729
    %v858 = vsel %vm602, %v794, %v730
    %v859 = vsel %vm603, %v795, %v731
    %v860 = vsel %vm604, %v796, %v732
    %v861 = vsel %vm605, %v797, %v733
    %v862 = vsel %vm606, %v798, %v734
    %v863 = vsel %vm607, %v799, %v735
    %v864 = vsel %vm608, %v800, %v736
    %v865 = vsel %vm609, %v801, %v737
    %v866 = vsel %vm610, %v802, %v738
    %v867 = vsel %vm611, %v803, %v739
    %v868 = vsel %vm612, %v804, %v740
    %v869 = vsel %vm613, %v805, %v741
    %v870 = vsel %vm614, %v806, %v742
    %v871 = vsel %vm615, %v807, %v743
    %v872 = vsel %vm616, %v808, %v744
    %v873 = vsel %vm617, %v809, %v745
    %v874 = vsel %vm618, %v810, %v746
    %v875 = vsel %vm619, %v811, %v747
    %v876 = vsel %vm620, %v812, %v748
    %v877 = vsel %vm621, %v813, %v749
    %v878 = vsel %vm622, %v814, %v750
    %v879 = vsel %vm623, %v815, %v751
    %v880 = vmax.f32 %v816, -28.571426
    %v881 = vmax.f32 %v817, -28.571426
    %v882 = vmax.f32 %v818, -28.571426
    %v883 = vmax.f32 %v819, -28.571426
    %v884 = vmax.f32 %v820, -28.571426
    %v885 = vmax.f32 %v821, -28.571426
    %v886 = vmax.f32 %v822, -28.571426
    %v887 = vmax.f32 %v823, -28.571426
    %v888 = vmax.f32 %v824, -28.571426
    %v889 = vmax.f32 %v825, -28.571426
    %v890 = vmax.f32 %v826, -28.571426
    %v891 = vmax.f32 %v827, -28.571426
    %v892 = vmax.f32 %v828, -28.571426
    %v893 = vmax.f32 %v829, -28.571426
    %v894 = vmax.f32 %v830, -28.571426
    %v895 = vmax.f32 %v831, -28.571426
    %v896 = vmax.f32 %v832, -28.571426
    %v897 = vmax.f32 %v833, -28.571426
    %v898 = vmax.f32 %v834, -28.571426
    %v899 = vmax.f32 %v835, -28.571426
    %v900 = vmax.f32 %v836, -28.571426
    %v901 = vmax.f32 %v837, -28.571426
    %v902 = vmax.f32 %v838, -28.571426
    %v903 = vmax.f32 %v839, -28.571426
    %v904 = vmax.f32 %v840, -28.571426
    %v905 = vmax.f32 %v841, -28.571426
    %v906 = vmax.f32 %v842, -28.571426
    %v907 = vmax.f32 %v843, -28.571426
    %v908 = vmax.f32 %v844, -28.571426
    %v909 = vmax.f32 %v845, -28.571426
    %v910 = vmax.f32 %v846, -28.571426
    %v911 = vmax.f32 %v847, -28.571426
    %v912 = vmax.f32 %v848, -28.571426
    %v913 = vmax.f32 %v849, -28.571426
    %v914 = vmax.f32 %v850, -28.571426
    %v915 = vmax.f32 %v851, -28.571426
    %v916 = vmax.f32 %v852, -28.571426
    %v917 = vmax.f32 %v853, -28.571426
    %v918 = vmax.f32 %v854, -28.571426
    %v919 = vmax.f32 %v855, -28.571426
    %v920 = vmax.f32 %v856, -28.571426
    %v921 = vmax.f32 %v857, -28.571426
    %v922 = vmax.f32 %v858, -28.571426
    %v923 = vmax.f32 %v859, -28.571426
    %v924 = vmax.f32 %v860, -28.571426
    %v925 = vmax.f32 %v861, -28.571426
    %v926 = vmax.f32 %v862, -28.571426
    %v927 = vmax.f32 %v863, -28.571426
    %v928 = vmax.f32 %v864, -28.571426
    %v929 = vmax.f32 %v865, -28.571426
    %v930 = vmax.f32 %v866, -28.571426
    %v931 = vmax.f32 %v867, -28.571426
    %v932 = vmax.f32 %v868, -28.571426
    %v933 = vmax.f32 %v869, -28.571426
    %v934 = vmax.f32 %v870, -28.571426
    %v935 = vmax.f32 %v871, -28.571426
    %v936 = vmax.f32 %v872, -28.571426
    %v937 = vmax.f32 %v873, -28.571426
    %v938 = vmax.f32 %v874, -28.571426
    %v939 = vmax.f32 %v875, -28.571426
    %v940 = vmax.f32 %v876, -28.571426
    %v941 = vmax.f32 %v877, -28.571426
    %v942 = vmax.f32 %v878, -28.571426
    %v943 = vmax.f32 %v879, -28.571426
    %v944 = vmin.f32 %v880, 0.0
    %v945 = vmin.f32 %v881, 0.0
    %v946 = vmin.f32 %v882, 0.0
    %v947 = vmin.f32 %v883, 0.0
    %v948 = vmin.f32 %v884, 0.0
    %v949 = vmin.f32 %v885, 0.0
    %v950 = vmin.f32 %v886, 0.0
    %v951 = vmin.f32 %v887, 0.0
    %v952 = vmin.f32 %v888, 0.0
    %v953 = vmin.f32 %v889, 0.0
    %v954 = vmin.f32 %v890, 0.0
    %v955 = vmin.f32 %v891, 0.0
    %v956 = vmin.f32 %v892, 0.0
    %v957 = vmin.f32 %v893, 0.0
    %v958 = vmin.f32 %v894, 0.0
    %v959 = vmin.f32 %v895, 0.0
    %v960 = vmin.f32 %v896, 0.0
    %v961 = vmin.f32 %v897, 0.0
    %v962 = vmin.f32 %v898, 0.0
    %v963 = vmin.f32 %v899, 0.0
    %v964 = vmin.f32 %v900, 0.0
    %v965 = vmin.f32 %v901, 0.0
    %v966 = vmin.f32 %v902, 0.0
    %v967 = vmin.f32 %v903, 0.0
    %v968 = vmin.f32 %v904, 0.0
    %v969 = vmin.f32 %v905, 0.0
    %v970 = vmin.f32 %v906, 0.0
    %v971 = vmin.f32 %v907, 0.0
    %v972 = vmin.f32 %v908, 0.0
    %v973 = vmin.f32 %v909, 0.0
    %v974 = vmin.f32 %v910, 0.0
    %v975 = vmin.f32 %v911, 0.0
    %v976 = vmin.f32 %v912, 0.0
    %v977 = vmin.f32 %v913, 0.0
    %v978 = vmin.f32 %v914, 0.0
    %v979 = vmin.f32 %v915, 0.0
    %v980 = vmin.f32 %v916, 0.0
    %v981 = vmin.f32 %v917, 0.0
    %v982 = vmin.f32 %v918, 0.0
    %v983 = vmin.f32 %v919, 0.0
    %v984 = vmin.f32 %v920, 0.0
    %v985 = vmin.f32 %v921, 0.0
    %v986 = vmin.f32 %v922, 0.0
    %v987 = vmin.f32 %v923, 0.0
    %v988 = vmin.f32 %v924, 0.0
    %v989 = vmin.f32 %v925, 0.0
    %v990 = vmin.f32 %v926, 0.0
    %v991 = vmin.f32 %v927, 0.0
    %v992 = vmin.f32 %v928, 0.0
    %v993 = vmin.f32 %v929, 0.0
    %v994 = vmin.f32 %v930, 0.0
    %v995 = vmin.f32 %v931, 0.0
    %v996 = vmin.f32 %v932, 0.0
    %v997 = vmin.f32 %v933, 0.0
    %v998 = vmin.f32 %v934, 0.0
    %v999 = vmin.f32 %v935, 0.0
    %v1000 = vmin.f32 %v936, 0.0
    %v1001 = vmin.f32 %v937, 0.0
    %v1002 = vmin.f32 %v938, 0.0
    %v1003 = vmin.f32 %v939, 0.0
    %v1004 = vmin.f32 %v940, 0.0
    %v1005 = vmin.f32 %v941, 0.0
    %v1006 = vmin.f32 %v942, 0.0
    %v1007 = vmin.f32 %v943, 0.0
    %s1008 = smul.u32 0, 256
    %v1009 = vlaneseq
    %v1010 = vand.u32 %v1009, 127
    %v1011 = vadd.s32 %v1010, 128
    %v1012 = vstv %s1008
    %v1013 = vadd.s32 %v1012, %v1010
    %v1014 = vadd.s32 %v1012, %v1011
    %s1015 = smul.u32 0, 256
    %v1016 = vlaneseq
    %v1017 = vshrl.u32 %v1016, 7
    %v1018 = vadd.s32 %v1017, 8
    %v1019 = vadd.s32 %v1017, 16
    %v1020 = vadd.s32 %v1017, 24
    %v1021 = vadd.s32 %v1017, 32
    %v1022 = vadd.s32 %v1017, 40
    %v1023 = vadd.s32 %v1017, 48
    %v1024 = vadd.s32 %v1017, 56
    %v1025 = vadd.s32 %v1017, 64
    %v1026 = vadd.s32 %v1017, 72
    %v1027 = vadd.s32 %v1017, 80
    %v1028 = vadd.s32 %v1017, 88
    %v1029 = vadd.s32 %v1017, 96
    %v1030 = vadd.s32 %v1017, 104
    %v1031 = vadd.s32 %v1017, 112
    %v1032 = vadd.s32 %v1017, 120
    %v1033 = vadd.s32 %v1017, 128
    %v1034 = vadd.s32 %v1017, 136
    %v1035 = vadd.s32 %v1017, 144
    %v1036 = vadd.s32 %v1017, 152
    %v1037 = vadd.s32 %v1017, 160
    %v1038 = vadd.s32 %v1017, 168
    %v1039 = vadd.s32 %v1017, 176
    %v1040 = vadd.s32 %v1017, 184
    %v1041 = vadd.s32 %v1017, 192
    %v1042 = vadd.s32 %v1017, 200
    %v1043 = vadd.s32 %v1017, 208
    %v1044 = vadd.s32 %v1017, 216
    %v1045 = vadd.s32 %v1017, 224
    %v1046 = vadd.s32 %v1017, 232
    %v1047 = vadd.s32 %v1017, 240
    %v1048 = vadd.s32 %v1017, 248
    %v1049 = vstv %s1015
    %v1050 = vadd.s32 %v1049, %v1017
    %v1051 = vadd.s32 %v1049, %v1018
    %v1052 = vadd.s32 %v1049, %v1019
    %v1053 = vadd.s32 %v1049, %v1020
    %v1054 = vadd.s32 %v1049, %v1021
    %v1055 = vadd.s32 %v1049, %v1022
    %v1056 = vadd.s32 %v1049, %v1023
    %v1057 = vadd.s32 %v1049, %v1024
    %v1058 = vadd.s32 %v1049, %v1025
    %v1059 = vadd.s32 %v1049, %v1026
    %v1060 = vadd.s32 %v1049, %v1027
    %v1061 = vadd.s32 %v1049, %v1028
    %v1062 = vadd.s32 %v1049, %v1029
    %v1063 = vadd.s32 %v1049, %v1030
    %v1064 = vadd.s32 %v1049, %v1031
    %v1065 = vadd.s32 %v1049, %v1032
    %v1066 = vadd.s32 %v1049, %v1033
    %v1067 = vadd.s32 %v1049, %v1034
    %v1068 = vadd.s32 %v1049, %v1035
    %v1069 = vadd.s32 %v1049, %v1036
    %v1070 = vadd.s32 %v1049, %v1037
    %v1071 = vadd.s32 %v1049, %v1038
    %v1072 = vadd.s32 %v1049, %v1039
    %v1073 = vadd.s32 %v1049, %v1040
    %v1074 = vadd.s32 %v1049, %v1041
    %v1075 = vadd.s32 %v1049, %v1042
    %v1076 = vadd.s32 %v1049, %v1043
    %v1077 = vadd.s32 %v1049, %v1044
    %v1078 = vadd.s32 %v1049, %v1045
    %v1079 = vadd.s32 %v1049, %v1046
    %v1080 = vadd.s32 %v1049, %v1047
    %v1081 = vadd.s32 %v1049, %v1048
    %vm1082 = vcmp.ne.s32.totalorder %v1013, %v1050
    %vm1083 = vcmp.ne.s32.totalorder %v1014, %v1050
    %vm1084 = vcmp.ne.s32.totalorder %v1013, %v1051
    %vm1085 = vcmp.ne.s32.totalorder %v1014, %v1051
    %vm1086 = vcmp.ne.s32.totalorder %v1013, %v1052
    %vm1087 = vcmp.ne.s32.totalorder %v1014, %v1052
    %vm1088 = vcmp.ne.s32.totalorder %v1013, %v1053
    %vm1089 = vcmp.ne.s32.totalorder %v1014, %v1053
    %vm1090 = vcmp.ne.s32.totalorder %v1013, %v1054
    %vm1091 = vcmp.ne.s32.totalorder %v1014, %v1054
    %vm1092 = vcmp.ne.s32.totalorder %v1013, %v1055
    %vm1093 = vcmp.ne.s32.totalorder %v1014, %v1055
    %vm1094 = vcmp.ne.s32.totalorder %v1013, %v1056
    %vm1095 = vcmp.ne.s32.totalorder %v1014, %v1056
    %vm1096 = vcmp.ne.s32.totalorder %v1013, %v1057
    %vm1097 = vcmp.ne.s32.totalorder %v1014, %v1057
    %vm1098 = vcmp.ne.s32.totalorder %v1013, %v1058
    %vm1099 = vcmp.ne.s32.totalorder %v1014, %v1058
    %vm1100 = vcmp.ne.s32.totalorder %v1013, %v1059
    %vm1101 = vcmp.ne.s32.totalorder %v1014, %v1059
    %vm1102 = vcmp.ne.s32.totalorder %v1013, %v1060
    %vm1103 = vcmp.ne.s32.totalorder %v1014, %v1060
    %vm1104 = vcmp.ne.s32.totalorder %v1013, %v1061
    %vm1105 = vcmp.ne.s32.totalorder %v1014, %v1061
    %vm1106 = vcmp.ne.s32.totalorder %v1013, %v1062
    %vm1107 = vcmp.ne.s32.totalorder %v1014, %v1062
    %vm1108 = vcmp.ne.s32.totalorder %v1013, %v1063
    %vm1109 = vcmp.ne.s32.totalorder %v1014, %v1063
    %vm1110 = vcmp.ne.s32.totalorder %v1013, %v1064
    %vm1111 = vcmp.ne.s32.totalorder %v1014, %v1064
    %vm1112 = vcmp.ne.s32.totalorder %v1013, %v1065
    %vm1113 = vcmp.ne.s32.totalorder %v1014, %v1065
    %vm1114 = vcmp.ne.s32.totalorder %v1013, %v1066
    %vm1115 = vcmp.ne.s32.totalorder %v1014, %v1066
    %vm1116 = vcmp.ne.s32.totalorder %v1013, %v1067
    %vm1117 = vcmp.ne.s32.totalorder %v1014, %v1067
    %vm1118 = vcmp.ne.s32.totalorder %v1013, %v1068
    %vm1119 = vcmp.ne.s32.totalorder %v1014, %v1068
    %vm1120 = vcmp.ne.s32.totalorder %v1013, %v1069
    %vm1121 = vcmp.ne.s32.totalorder %v1014, %v1069
    %vm1122 = vcmp.ne.s32.totalorder %v1013, %v1070
    %vm1123 = vcmp.ne.s32.totalorder %v1014, %v1070
    %vm1124 = vcmp.ne.s32.totalorder %v1013, %v1071
    %vm1125 = vcmp.ne.s32.totalorder %v1014, %v1071
    %vm1126 = vcmp.ne.s32.totalorder %v1013, %v1072
    %vm1127 = vcmp.ne.s32.totalorder %v1014, %v1072
    %vm1128 = vcmp.ne.s32.totalorder %v1013, %v1073
    %vm1129 = vcmp.ne.s32.totalorder %v1014, %v1073
    %vm1130 = vcmp.ne.s32.totalorder %v1013, %v1074
    %vm1131 = vcmp.ne.s32.totalorder %v1014, %v1074
    %vm1132 = vcmp.ne.s32.totalorder %v1013, %v1075
    %vm1133 = vcmp.ne.s32.totalorder %v1014, %v1075
    %vm1134 = vcmp.ne.s32.totalorder %v1013, %v1076
    %vm1135 = vcmp.ne.s32.totalorder %v1014, %v1076
    %vm1136 = vcmp.ne.s32.totalorder %v1013, %v1077
    %vm1137 = vcmp.ne.s32.totalorder %v1014, %v1077
    %vm1138 = vcmp.ne.s32.totalorder %v1013, %v1078
    %vm1139 = vcmp.ne.s32.totalorder %v1014, %v1078
    %vm1140 = vcmp.ne.s32.totalorder %v1013, %v1079
    %vm1141 = vcmp.ne.s32.totalorder %v1014, %v1079
    %vm1142 = vcmp.ne.s32.totalorder %v1013, %v1080
    %vm1143 = vcmp.ne.s32.totalorder %v1014, %v1080
    %vm1144 = vcmp.ne.s32.totalorder %v1013, %v1081
    %vm1145 = vcmp.ne.s32.totalorder %v1014, %v1081
    %vm1146 = vcmp.lt.s32.totalorder %v1013, 16
    %vm1147 = vcmp.lt.s32.totalorder %v1014, 16
    %v1148 = vsel %vm1146, 1, 0
    %v1149 = vsel %vm1147, 1, 0
    %vm1150 = vcmp.eq.s32.totalorder %v1148, 1
    %vm1151 = vcmp.eq.s32.totalorder %v1149, 1
    %vm1152 = vmand %vm1082, %vm1150
    %vm1153 = vmand %vm1083, %vm1151
    %vm1154 = vmand %vm1084, %vm1150
    %vm1155 = vmand %vm1085, %vm1151
    %vm1156 = vmand %vm1086, %vm1150
    %vm1157 = vmand %vm1087, %vm1151
    %vm1158 = vmand %vm1088, %vm1150
    %vm1159 = vmand %vm1089, %vm1151
    %vm1160 = vmand %vm1090, %vm1150
    %vm1161 = vmand %vm1091, %vm1151
    %vm1162 = vmand %vm1092, %vm1150
    %vm1163 = vmand %vm1093, %vm1151
    %vm1164 = vmand %vm1094, %vm1150
    %vm1165 = vmand %vm1095, %vm1151
    %vm1166 = vmand %vm1096, %vm1150
    %vm1167 = vmand %vm1097, %vm1151
    %vm1168 = vmand %vm1098, %vm1150
    %vm1169 = vmand %vm1099, %vm1151
    %vm1170 = vmand %vm1100, %vm1150
    %vm1171 = vmand %vm1101, %vm1151
    %vm1172 = vmand %vm1102, %vm1150
    %vm1173 = vmand %vm1103, %vm1151
    %vm1174 = vmand %vm1104, %vm1150
    %vm1175 = vmand %vm1105, %vm1151
    %vm1176 = vmand %vm1106, %vm1150
    %vm1177 = vmand %vm1107, %vm1151
    %vm1178 = vmand %vm1108, %vm1150
    %vm1179 = vmand %vm1109, %vm1151
    %vm1180 = vmand %vm1110, %vm1150
    %vm1181 = vmand %vm1111, %vm1151
    %vm1182 = vmand %vm1112, %vm1150
    %vm1183 = vmand %vm1113, %vm1151
    %vm1184 = vmand %vm1114, %vm1150
    %vm1185 = vmand %vm1115, %vm1151
    %vm1186 = vmand %vm1116, %vm1150
    %vm1187 = vmand %vm1117, %vm1151
    %vm1188 = vmand %vm1118, %vm1150
    %vm1189 = vmand %vm1119, %vm1151
    %vm1190 = vmand %vm1120, %vm1150
    %vm1191 = vmand %vm1121, %vm1151
    %vm1192 = vmand %vm1122, %vm1150
    %vm1193 = vmand %vm1123, %vm1151
    %vm1194 = vmand %vm1124, %vm1150
    %vm1195 = vmand %vm1125, %vm1151
    %vm1196 = vmand %vm1126, %vm1150
    %vm1197 = vmand %vm1127, %vm1151
    %vm1198 = vmand %vm1128, %vm1150
    %vm1199 = vmand %vm1129, %vm1151
    %vm1200 = vmand %vm1130, %vm1150
    %vm1201 = vmand %vm1131, %vm1151
    %vm1202 = vmand %vm1132, %vm1150
    %vm1203 = vmand %vm1133, %vm1151
    %vm1204 = vmand %vm1134, %vm1150
    %vm1205 = vmand %vm1135, %vm1151
    %vm1206 = vmand %vm1136, %vm1150
    %vm1207 = vmand %vm1137, %vm1151
    %vm1208 = vmand %vm1138, %vm1150
    %vm1209 = vmand %vm1139, %vm1151
    %vm1210 = vmand %vm1140, %vm1150
    %vm1211 = vmand %vm1141, %vm1151
    %vm1212 = vmand %vm1142, %vm1150
    %vm1213 = vmand %vm1143, %vm1151
    %vm1214 = vmand %vm1144, %vm1150
    %vm1215 = vmand %vm1145, %vm1151
    %vm1216 = vmand %vm560, %vm1152
    %vm1217 = vmand %vm561, %vm1153
    %vm1218 = vmand %vm562, %vm1154
    %vm1219 = vmand %vm563, %vm1155
    %vm1220 = vmand %vm564, %vm1156
    %vm1221 = vmand %vm565, %vm1157
    %vm1222 = vmand %vm566, %vm1158
    %vm1223 = vmand %vm567, %vm1159
    %vm1224 = vmand %vm568, %vm1160
    %vm1225 = vmand %vm569, %vm1161
    %vm1226 = vmand %vm570, %vm1162
    %vm1227 = vmand %vm571, %vm1163
    %vm1228 = vmand %vm572, %vm1164
    %vm1229 = vmand %vm573, %vm1165
    %vm1230 = vmand %vm574, %vm1166
    %vm1231 = vmand %vm575, %vm1167
    %vm1232 = vmand %vm576, %vm1168
    %vm1233 = vmand %vm577, %vm1169
    %vm1234 = vmand %vm578, %vm1170
    %vm1235 = vmand %vm579, %vm1171
    %vm1236 = vmand %vm580, %vm1172
    %vm1237 = vmand %vm581, %vm1173
    %vm1238 = vmand %vm582, %vm1174
    %vm1239 = vmand %vm583, %vm1175
    %vm1240 = vmand %vm584, %vm1176
    %vm1241 = vmand %vm585, %vm1177
    %vm1242 = vmand %vm586, %vm1178
    %vm1243 = vmand %vm587, %vm1179
    %vm1244 = vmand %vm588, %vm1180
    %vm1245 = vmand %vm589, %vm1181
    %vm1246 = vmand %vm590, %vm1182
    %vm1247 = vmand %vm591, %vm1183
    %vm1248 = vmand %vm592, %vm1184
    %vm1249 = vmand %vm593, %vm1185
    %vm1250 = vmand %vm594, %vm1186
    %vm1251 = vmand %vm595, %vm1187
    %vm1252 = vmand %vm596, %vm1188
    %vm1253 = vmand %vm597, %vm1189
    %vm1254 = vmand %vm598, %vm1190
    %vm1255 = vmand %vm599, %vm1191
    %vm1256 = vmand %vm600, %vm1192
    %vm1257 = vmand %vm601, %vm1193
    %vm1258 = vmand %vm602, %vm1194
    %vm1259 = vmand %vm603, %vm1195
    %vm1260 = vmand %vm604, %vm1196
    %vm1261 = vmand %vm605, %vm1197
    %vm1262 = vmand %vm606, %vm1198
    %vm1263 = vmand %vm607, %vm1199
    %vm1264 = vmand %vm608, %vm1200
    %vm1265 = vmand %vm609, %vm1201
    %vm1266 = vmand %vm610, %vm1202
    %vm1267 = vmand %vm611, %vm1203
    %vm1268 = vmand %vm612, %vm1204
    %vm1269 = vmand %vm613, %vm1205
    %vm1270 = vmand %vm614, %vm1206
    %vm1271 = vmand %vm615, %vm1207
    %vm1272 = vmand %vm616, %vm1208
    %vm1273 = vmand %vm617, %vm1209
    %vm1274 = vmand %vm618, %vm1210
    %vm1275 = vmand %vm619, %vm1211
    %vm1276 = vmand %vm620, %vm1212
    %vm1277 = vmand %vm621, %vm1213
    %vm1278 = vmand %vm622, %vm1214
    %vm1279 = vmand %vm623, %vm1215
    %v1280 = vld [vmem:[%s4] sm:$0xff]
    %v1281 = vld [vmem:[%s4 + $0x8] sm:$0xff]
    %v1282 = vld [vmem:[%s4 + $0x10] sm:$0xff]
    %v1283 = vld [vmem:[%s4 + $0x18] sm:$0xff]
    %v1284 = vld [vmem:[%s4 + $0x20] sm:$0xff]
    %v1285 = vld [vmem:[%s4 + $0x28] sm:$0xff]
    %v1286 = vld [vmem:[%s4 + $0x30] sm:$0xff]
    %v1287 = vld [vmem:[%s4 + $0x38] sm:$0xff]
    %v1288 = vld [vmem:[%s4 + $0x40] sm:$0xff]
    %v1289 = vld [vmem:[%s4 + $0x48] sm:$0xff]
    %v1290 = vld [vmem:[%s4 + $0x50] sm:$0xff]
    %v1291 = vld [vmem:[%s4 + $0x58] sm:$0xff]
    %v1292 = vld [vmem:[%s4 + $0x60] sm:$0xff]
    %v1293 = vld [vmem:[%s4 + $0x68] sm:$0xff]
    %v1294 = vld [vmem:[%s4 + $0x70] sm:$0xff]
    %v1295 = vld [vmem:[%s4 + $0x78] sm:$0xff]
    %v1296 = vld [vmem:[%s4 + $0x80] sm:$0xff]
    %v1297 = vld [vmem:[%s4 + $0x88] sm:$0xff]
    %v1298 = vld [vmem:[%s4 + $0x90] sm:$0xff]
    %v1299 = vld [vmem:[%s4 + $0x98] sm:$0xff]
    %v1300 = vld [vmem:[%s4 + $0xa0] sm:$0xff]
    %v1301 = vld [vmem:[%s4 + $0xa8] sm:$0xff]
    %v1302 = vld [vmem:[%s4 + $0xb0] sm:$0xff]
    %v1303 = vld [vmem:[%s4 + $0xb8] sm:$0xff]
    %v1304 = vld [vmem:[%s4 + $0xc0] sm:$0xff]
    %v1305 = vld [vmem:[%s4 + $0xc8] sm:$0xff]
    %v1306 = vld [vmem:[%s4 + $0xd0] sm:$0xff]
    %v1307 = vld [vmem:[%s4 + $0xd8] sm:$0xff]
    %v1308 = vld [vmem:[%s4 + $0xe0] sm:$0xff]
    %v1309 = vld [vmem:[%s4 + $0xe8] sm:$0xff]
    %v1310 = vld [vmem:[%s4 + $0xf0] sm:$0xff]
    %v1311 = vld [vmem:[%s4 + $0xf8] sm:$0xff]
    %v1312 = vmul.f32 %v944, 1.442695
    %v1313 = vpow.pop %v1312
    %v1314 = vmul.f32 %v945, 1.442695
    %v1315 = vpow.pop %v1314
    %v1316 = vmul.f32 %v946, 1.442695
    %v1317 = vpow.pop %v1316
    %v1318 = vmul.f32 %v947, 1.442695
    %v1319 = vpow.pop %v1318
    %v1320 = vmul.f32 %v948, 1.442695
    %v1321 = vpow.pop %v1320
    %v1322 = vmul.f32 %v949, 1.442695
    %v1323 = vpow.pop %v1322
    %v1324 = vmul.f32 %v950, 1.442695
    %v1325 = vpow.pop %v1324
    %v1326 = vmul.f32 %v951, 1.442695
    %v1327 = vpow.pop %v1326
    %v1328 = vmul.f32 %v952, 1.442695
    %v1329 = vpow.pop %v1328
    %v1330 = vmul.f32 %v953, 1.442695
    %v1331 = vpow.pop %v1330
    %v1332 = vmul.f32 %v954, 1.442695
    %v1333 = vpow.pop %v1332
    %v1334 = vmul.f32 %v955, 1.442695
    %v1335 = vpow.pop %v1334
    %v1336 = vmul.f32 %v956, 1.442695
    %v1337 = vpow.pop %v1336
    %v1338 = vmul.f32 %v957, 1.442695
    %v1339 = vpow.pop %v1338
    %v1340 = vmul.f32 %v958, 1.442695
    %v1341 = vpow.pop %v1340
    %v1342 = vmul.f32 %v959, 1.442695
    %v1343 = vpow.pop %v1342
    %v1344 = vmul.f32 %v960, 1.442695
    %v1345 = vpow.pop %v1344
    %v1346 = vmul.f32 %v961, 1.442695
    %v1347 = vpow.pop %v1346
    %v1348 = vmul.f32 %v962, 1.442695
    %v1349 = vpow.pop %v1348
    %v1350 = vmul.f32 %v963, 1.442695
    %v1351 = vpow.pop %v1350
    %v1352 = vmul.f32 %v964, 1.442695
    %v1353 = vpow.pop %v1352
    %v1354 = vmul.f32 %v965, 1.442695
    %v1355 = vpow.pop %v1354
    %v1356 = vmul.f32 %v966, 1.442695
    %v1357 = vpow.pop %v1356
    %v1358 = vmul.f32 %v967, 1.442695
    %v1359 = vpow.pop %v1358
    %v1360 = vmul.f32 %v968, 1.442695
    %v1361 = vpow.pop %v1360
    %v1362 = vmul.f32 %v969, 1.442695
    %v1363 = vpow.pop %v1362
    %v1364 = vmul.f32 %v970, 1.442695
    %v1365 = vpow.pop %v1364
    %v1366 = vmul.f32 %v971, 1.442695
    %v1367 = vpow.pop %v1366
    %v1368 = vmul.f32 %v972, 1.442695
    %v1369 = vpow.pop %v1368
    %v1370 = vmul.f32 %v973, 1.442695
    %v1371 = vpow.pop %v1370
    %v1372 = vmul.f32 %v974, 1.442695
    %v1373 = vpow.pop %v1372
    %v1374 = vmul.f32 %v975, 1.442695
    %v1375 = vpow.pop %v1374
    %v1376 = vmul.f32 %v976, 1.442695
    %v1377 = vpow.pop %v1376
    %v1378 = vmul.f32 %v977, 1.442695
    %v1379 = vpow.pop %v1378
    %v1380 = vmul.f32 %v978, 1.442695
    %v1381 = vpow.pop %v1380
    %v1382 = vmul.f32 %v979, 1.442695
    %v1383 = vpow.pop %v1382
    %v1384 = vmul.f32 %v980, 1.442695
    %v1385 = vpow.pop %v1384
    %v1386 = vmul.f32 %v981, 1.442695
    %v1387 = vpow.pop %v1386
    %v1388 = vmul.f32 %v982, 1.442695
    %v1389 = vpow.pop %v1388
    %v1390 = vmul.f32 %v983, 1.442695
    %v1391 = vpow.pop %v1390
    %v1392 = vmul.f32 %v984, 1.442695
    %v1393 = vpow.pop %v1392
    %v1394 = vmul.f32 %v985, 1.442695
    %v1395 = vpow.pop %v1394
    %v1396 = vmul.f32 %v986, 1.442695
    %v1397 = vpow.pop %v1396
    %v1398 = vmul.f32 %v987, 1.442695
    %v1399 = vpow.pop %v1398
    %v1400 = vmul.f32 %v988, 1.442695
    %v1401 = vpow.pop %v1400
    %v1402 = vmul.f32 %v989, 1.442695
    %v1403 = vpow.pop %v1402
    %v1404 = vmul.f32 %v990, 1.442695
    %v1405 = vpow.pop %v1404
    %v1406 = vmul.f32 %v991, 1.442695
    %v1407 = vpow.pop %v1406
    %v1408 = vmul.f32 %v992, 1.442695
    %v1409 = vpow.pop %v1408
    %v1410 = vmul.f32 %v993, 1.442695
    %v1411 = vpow.pop %v1410
    %v1412 = vmul.f32 %v994, 1.442695
    %v1413 = vpow.pop %v1412
    %v1414 = vmul.f32 %v995, 1.442695
    %v1415 = vpow.pop %v1414
    %v1416 = vmul.f32 %v996, 1.442695
    %v1417 = vpow.pop %v1416
    %v1418 = vmul.f32 %v997, 1.442695
    %v1419 = vpow.pop %v1418
    %v1420 = vmul.f32 %v998, 1.442695
    %v1421 = vpow.pop %v1420
    %v1422 = vmul.f32 %v999, 1.442695
    %v1423 = vpow.pop %v1422
    %v1424 = vmul.f32 %v1000, 1.442695
    %v1425 = vpow.pop %v1424
    %v1426 = vmul.f32 %v1001, 1.442695
    %v1427 = vpow.pop %v1426
    %v1428 = vmul.f32 %v1002, 1.442695
    %v1429 = vpow.pop %v1428
    %v1430 = vmul.f32 %v1003, 1.442695
    %v1431 = vpow.pop %v1430
    %v1432 = vmul.f32 %v1004, 1.442695
    %v1433 = vpow.pop %v1432
    %v1434 = vmul.f32 %v1005, 1.442695
    %v1435 = vpow.pop %v1434
    %v1436 = vmul.f32 %v1006, 1.442695
    %v1437 = vpow.pop %v1436
    %v1438 = vmul.f32 %v1007, 1.442695
    %v1439 = vpow.pop %v1438
    %v1440 = vsel %vm1152, %v1313, 0.0
    %v1441 = vsel %vm1153, %v1315, 0.0
    %v1442 = vsel %vm1154, %v1317, 0.0
    %v1443 = vsel %vm1155, %v1319, 0.0
    %v1444 = vsel %vm1156, %v1321, 0.0
    %v1445 = vsel %vm1157, %v1323, 0.0
    %v1446 = vsel %vm1158, %v1325, 0.0
    %v1447 = vsel %vm1159, %v1327, 0.0
    %v1448 = vsel %vm1160, %v1329, 0.0
    %v1449 = vsel %vm1161, %v1331, 0.0
    %v1450 = vsel %vm1162, %v1333, 0.0
    %v1451 = vsel %vm1163, %v1335, 0.0
    %v1452 = vsel %vm1164, %v1337, 0.0
    %v1453 = vsel %vm1165, %v1339, 0.0
    %v1454 = vsel %vm1166, %v1341, 0.0
    %v1455 = vsel %vm1167, %v1343, 0.0
    %v1456 = vsel %vm1168, %v1345, 0.0
    %v1457 = vsel %vm1169, %v1347, 0.0
    %v1458 = vsel %vm1170, %v1349, 0.0
    %v1459 = vsel %vm1171, %v1351, 0.0
    %v1460 = vsel %vm1172, %v1353, 0.0
    %v1461 = vsel %vm1173, %v1355, 0.0
    %v1462 = vsel %vm1174, %v1357, 0.0
    %v1463 = vsel %vm1175, %v1359, 0.0
    %v1464 = vsel %vm1176, %v1361, 0.0
    %v1465 = vsel %vm1177, %v1363, 0.0
    %v1466 = vsel %vm1178, %v1365, 0.0
    %v1467 = vsel %vm1179, %v1367, 0.0
    %v1468 = vsel %vm1180, %v1369, 0.0
    %v1469 = vsel %vm1181, %v1371, 0.0
    %v1470 = vsel %vm1182, %v1373, 0.0
    %v1471 = vsel %vm1183, %v1375, 0.0
    %v1472 = vsel %vm1184, %v1377, 0.0
    %v1473 = vsel %vm1185, %v1379, 0.0
    %v1474 = vsel %vm1186, %v1381, 0.0
    %v1475 = vsel %vm1187, %v1383, 0.0
    %v1476 = vsel %vm1188, %v1385, 0.0
    %v1477 = vsel %vm1189, %v1387, 0.0
    %v1478 = vsel %vm1190, %v1389, 0.0
    %v1479 = vsel %vm1191, %v1391, 0.0
    %v1480 = vsel %vm1192, %v1393, 0.0
    %v1481 = vsel %vm1193, %v1395, 0.0
    %v1482 = vsel %vm1194, %v1397, 0.0
    %v1483 = vsel %vm1195, %v1399, 0.0
    %v1484 = vsel %vm1196, %v1401, 0.0
    %v1485 = vsel %vm1197, %v1403, 0.0
    %v1486 = vsel %vm1198, %v1405, 0.0
    %v1487 = vsel %vm1199, %v1407, 0.0
    %v1488 = vsel %vm1200, %v1409, 0.0
    %v1489 = vsel %vm1201, %v1411, 0.0
    %v1490 = vsel %vm1202, %v1413, 0.0
    %v1491 = vsel %vm1203, %v1415, 0.0
    %v1492 = vsel %vm1204, %v1417, 0.0
    %v1493 = vsel %vm1205, %v1419, 0.0
    %v1494 = vsel %vm1206, %v1421, 0.0
    %v1495 = vsel %vm1207, %v1423, 0.0
    %v1496 = vsel %vm1208, %v1425, 0.0
    %v1497 = vsel %vm1209, %v1427, 0.0
    %v1498 = vsel %vm1210, %v1429, 0.0
    %v1499 = vsel %vm1211, %v1431, 0.0
    %v1500 = vsel %vm1212, %v1433, 0.0
    %v1501 = vsel %vm1213, %v1435, 0.0
    %v1502 = vsel %vm1214, %v1437, 0.0
    %v1503 = vsel %vm1215, %v1439, 0.0
    %v1504 = vadd.f32 %v1440, %v1441
    %1505 = vadd.xlane.f32.xlu0 %v1504
    %v1506 = vpop.xlane.xlu0 %1505
    %v1507 = vadd.f32 %v1442, %v1443
    %1508 = vadd.xlane.f32.xlu0 %v1507
    %v1509 = vpop.xlane.xlu0 %1508
    %v1510 = vadd.f32 %v1444, %v1445
    %1511 = vadd.xlane.f32.xlu0 %v1510
    %v1512 = vpop.xlane.xlu0 %1511
    %v1513 = vadd.f32 %v1446, %v1447
    %1514 = vadd.xlane.f32.xlu0 %v1513
    %v1515 = vpop.xlane.xlu0 %1514
    %v1516 = vadd.f32 %v1448, %v1449
    %1517 = vadd.xlane.f32.xlu0 %v1516
    %v1518 = vpop.xlane.xlu0 %1517
    %v1519 = vadd.f32 %v1450, %v1451
    %1520 = vadd.xlane.f32.xlu0 %v1519
    %v1521 = vpop.xlane.xlu0 %1520
    %v1522 = vadd.f32 %v1452, %v1453
    %1523 = vadd.xlane.f32.xlu0 %v1522
    %v1524 = vpop.xlane.xlu0 %1523
    %v1525 = vadd.f32 %v1454, %v1455
    %1526 = vadd.xlane.f32.xlu0 %v1525
    %v1527 = vpop.xlane.xlu0 %1526
    %v1528 = vadd.f32 %v1456, %v1457
    %1529 = vadd.xlane.f32.xlu0 %v1528
    %v1530 = vpop.xlane.xlu0 %1529
    %v1531 = vadd.f32 %v1458, %v1459
    %1532 = vadd.xlane.f32.xlu0 %v1531
    %v1533 = vpop.xlane.xlu0 %1532
    %v1534 = vadd.f32 %v1460, %v1461
    %1535 = vadd.xlane.f32.xlu0 %v1534
    %v1536 = vpop.xlane.xlu0 %1535
    %v1537 = vadd.f32 %v1462, %v1463
    %1538 = vadd.xlane.f32.xlu0 %v1537
    %v1539 = vpop.xlane.xlu0 %1538
    %v1540 = vadd.f32 %v1464, %v1465
    %1541 = vadd.xlane.f32.xlu0 %v1540
    %v1542 = vpop.xlane.xlu0 %1541
    %v1543 = vadd.f32 %v1466, %v1467
    %1544 = vadd.xlane.f32.xlu0 %v1543
    %v1545 = vpop.xlane.xlu0 %1544
    %v1546 = vadd.f32 %v1468, %v1469
    %1547 = vadd.xlane.f32.xlu0 %v1546
    %v1548 = vpop.xlane.xlu0 %1547
    %v1549 = vadd.f32 %v1470, %v1471
    %1550 = vadd.xlane.f32.xlu0 %v1549
    %v1551 = vpop.xlane.xlu0 %1550
    %v1552 = vadd.f32 %v1472, %v1473
    %1553 = vadd.xlane.f32.xlu0 %v1552
    %v1554 = vpop.xlane.xlu0 %1553
    %v1555 = vadd.f32 %v1474, %v1475
    %1556 = vadd.xlane.f32.xlu0 %v1555
    %v1557 = vpop.xlane.xlu0 %1556
    %v1558 = vadd.f32 %v1476, %v1477
    %1559 = vadd.xlane.f32.xlu0 %v1558
    %v1560 = vpop.xlane.xlu0 %1559
    %v1561 = vadd.f32 %v1478, %v1479
    %1562 = vadd.xlane.f32.xlu0 %v1561
    %v1563 = vpop.xlane.xlu0 %1562
    %v1564 = vadd.f32 %v1480, %v1481
    %1565 = vadd.xlane.f32.xlu0 %v1564
    %v1566 = vpop.xlane.xlu0 %1565
    %v1567 = vadd.f32 %v1482, %v1483
    %1568 = vadd.xlane.f32.xlu0 %v1567
    %v1569 = vpop.xlane.xlu0 %1568
    %v1570 = vadd.f32 %v1484, %v1485
    %1571 = vadd.xlane.f32.xlu0 %v1570
    %v1572 = vpop.xlane.xlu0 %1571
    %v1573 = vadd.f32 %v1486, %v1487
    %1574 = vadd.xlane.f32.xlu0 %v1573
    %v1575 = vpop.xlane.xlu0 %1574
    %v1576 = vadd.f32 %v1488, %v1489
    %1577 = vadd.xlane.f32.xlu0 %v1576
    %v1578 = vpop.xlane.xlu0 %1577
    %v1579 = vadd.f32 %v1490, %v1491
    %1580 = vadd.xlane.f32.xlu0 %v1579
    %v1581 = vpop.xlane.xlu0 %1580
    %v1582 = vadd.f32 %v1492, %v1493
    %1583 = vadd.xlane.f32.xlu0 %v1582
    %v1584 = vpop.xlane.xlu0 %1583
    %v1585 = vadd.f32 %v1494, %v1495
    %1586 = vadd.xlane.f32.xlu0 %v1585
    %v1587 = vpop.xlane.xlu0 %1586
    %v1588 = vadd.f32 %v1496, %v1497
    %1589 = vadd.xlane.f32.xlu0 %v1588
    %v1590 = vpop.xlane.xlu0 %1589
    %v1591 = vadd.f32 %v1498, %v1499
    %1592 = vadd.xlane.f32.xlu0 %v1591
    %v1593 = vpop.xlane.xlu0 %1592
    %v1594 = vadd.f32 %v1500, %v1501
    %1595 = vadd.xlane.f32.xlu0 %v1594
    %v1596 = vpop.xlane.xlu0 %1595
    %v1597 = vadd.f32 %v1502, %v1503
    %1598 = vadd.xlane.f32.xlu0 %v1597
    %v1599 = vpop.xlane.xlu0 %1598
    %v1600 = vadd.f32 %v1280, %v1506
    %v1601 = vadd.f32 %v1281, %v1509
    %v1602 = vadd.f32 %v1282, %v1512
    %v1603 = vadd.f32 %v1283, %v1515
    %v1604 = vadd.f32 %v1284, %v1518
    %v1605 = vadd.f32 %v1285, %v1521
    %v1606 = vadd.f32 %v1286, %v1524
    %v1607 = vadd.f32 %v1287, %v1527
    %v1608 = vadd.f32 %v1288, %v1530
    %v1609 = vadd.f32 %v1289, %v1533
    %v1610 = vadd.f32 %v1290, %v1536
    %v1611 = vadd.f32 %v1291, %v1539
    %v1612 = vadd.f32 %v1292, %v1542
    %v1613 = vadd.f32 %v1293, %v1545
    %v1614 = vadd.f32 %v1294, %v1548
    %v1615 = vadd.f32 %v1295, %v1551
    %v1616 = vadd.f32 %v1296, %v1554
    %v1617 = vadd.f32 %v1297, %v1557
    %v1618 = vadd.f32 %v1298, %v1560
    %v1619 = vadd.f32 %v1299, %v1563
    %v1620 = vadd.f32 %v1300, %v1566
    %v1621 = vadd.f32 %v1301, %v1569
    %v1622 = vadd.f32 %v1302, %v1572
    %v1623 = vadd.f32 %v1303, %v1575
    %v1624 = vadd.f32 %v1304, %v1578
    %v1625 = vadd.f32 %v1305, %v1581
    %v1626 = vadd.f32 %v1306, %v1584
    %v1627 = vadd.f32 %v1307, %v1587
    %v1628 = vadd.f32 %v1308, %v1590
    %v1629 = vadd.f32 %v1309, %v1593
    %v1630 = vadd.f32 %v1310, %v1596
    %v1631 = vadd.f32 %v1311, %v1599
    %vm1632 = vcmask 7168
    %1633 = vst.msk [vmem:[%s4] sm:$0xff] %vm1632, %v1600
    %1634 = vst.msk [vmem:[%s4 + $0x8] sm:$0xff] %vm1632, %v1601
    %1635 = vst.msk [vmem:[%s4 + $0x10] sm:$0xff] %vm1632, %v1602
    %1636 = vst.msk [vmem:[%s4 + $0x18] sm:$0xff] %vm1632, %v1603
    %1637 = vst.msk [vmem:[%s4 + $0x20] sm:$0xff] %vm1632, %v1604
    %1638 = vst.msk [vmem:[%s4 + $0x28] sm:$0xff] %vm1632, %v1605
    %1639 = vst.msk [vmem:[%s4 + $0x30] sm:$0xff] %vm1632, %v1606
    %1640 = vst.msk [vmem:[%s4 + $0x38] sm:$0xff] %vm1632, %v1607
    %1641 = vst.msk [vmem:[%s4 + $0x40] sm:$0xff] %vm1632, %v1608
    %1642 = vst.msk [vmem:[%s4 + $0x48] sm:$0xff] %vm1632, %v1609
    %1643 = vst.msk [vmem:[%s4 + $0x50] sm:$0xff] %vm1632, %v1610
    %1644 = vst.msk [vmem:[%s4 + $0x58] sm:$0xff] %vm1632, %v1611
    %1645 = vst.msk [vmem:[%s4 + $0x60] sm:$0xff] %vm1632, %v1612
    %1646 = vst.msk [vmem:[%s4 + $0x68] sm:$0xff] %vm1632, %v1613
    %1647 = vst.msk [vmem:[%s4 + $0x70] sm:$0xff] %vm1632, %v1614
    %1648 = vst.msk [vmem:[%s4 + $0x78] sm:$0xff] %vm1632, %v1615
    %1649 = vst.msk [vmem:[%s4 + $0x80] sm:$0xff] %vm1632, %v1616
    %1650 = vst.msk [vmem:[%s4 + $0x88] sm:$0xff] %vm1632, %v1617
    %1651 = vst.msk [vmem:[%s4 + $0x90] sm:$0xff] %vm1632, %v1618
    %1652 = vst.msk [vmem:[%s4 + $0x98] sm:$0xff] %vm1632, %v1619
    %1653 = vst.msk [vmem:[%s4 + $0xa0] sm:$0xff] %vm1632, %v1620
    %1654 = vst.msk [vmem:[%s4 + $0xa8] sm:$0xff] %vm1632, %v1621
    %1655 = vst.msk [vmem:[%s4 + $0xb0] sm:$0xff] %vm1632, %v1622
    %1656 = vst.msk [vmem:[%s4 + $0xb8] sm:$0xff] %vm1632, %v1623
    %1657 = vst.msk [vmem:[%s4 + $0xc0] sm:$0xff] %vm1632, %v1624
    %1658 = vst.msk [vmem:[%s4 + $0xc8] sm:$0xff] %vm1632, %v1625
    %1659 = vst.msk [vmem:[%s4 + $0xd0] sm:$0xff] %vm1632, %v1626
    %1660 = vst.msk [vmem:[%s4 + $0xd8] sm:$0xff] %vm1632, %v1627
    %1661 = vst.msk [vmem:[%s4 + $0xe0] sm:$0xff] %vm1632, %v1628
    %1662 = vst.msk [vmem:[%s4 + $0xe8] sm:$0xff] %vm1632, %v1629
    %1663 = vst.msk [vmem:[%s4 + $0xf0] sm:$0xff] %vm1632, %v1630
    %1664 = vst.msk [vmem:[%s4 + $0xf8] sm:$0xff] %vm1632, %v1631
    %v1665 = vld [vmem:[%s5] sm:$0xff]
    %v1666 = vld [vmem:[%s5 + $0x8] sm:$0xff]
    %v1667 = vld [vmem:[%s5 + $0x10] sm:$0xff]
    %v1668 = vld [vmem:[%s5 + $0x18] sm:$0xff]
    %v1669 = vld [vmem:[%s5 + $0x20] sm:$0xff]
    %v1670 = vld [vmem:[%s5 + $0x28] sm:$0xff]
    %v1671 = vld [vmem:[%s5 + $0x30] sm:$0xff]
    %v1672 = vld [vmem:[%s5 + $0x38] sm:$0xff]
    %v1673 = vld [vmem:[%s5 + $0x40] sm:$0xff]
    %v1674 = vld [vmem:[%s5 + $0x48] sm:$0xff]
    %v1675 = vld [vmem:[%s5 + $0x50] sm:$0xff]
    %v1676 = vld [vmem:[%s5 + $0x58] sm:$0xff]
    %v1677 = vld [vmem:[%s5 + $0x60] sm:$0xff]
    %v1678 = vld [vmem:[%s5 + $0x68] sm:$0xff]
    %v1679 = vld [vmem:[%s5 + $0x70] sm:$0xff]
    %v1680 = vld [vmem:[%s5 + $0x78] sm:$0xff]
    %v1681 = vld [vmem:[%s5 + $0x80] sm:$0xff]
    %v1682 = vld [vmem:[%s5 + $0x88] sm:$0xff]
    %v1683 = vld [vmem:[%s5 + $0x90] sm:$0xff]
    %v1684 = vld [vmem:[%s5 + $0x98] sm:$0xff]
    %v1685 = vld [vmem:[%s5 + $0xa0] sm:$0xff]
    %v1686 = vld [vmem:[%s5 + $0xa8] sm:$0xff]
    %v1687 = vld [vmem:[%s5 + $0xb0] sm:$0xff]
    %v1688 = vld [vmem:[%s5 + $0xb8] sm:$0xff]
    %v1689 = vld [vmem:[%s5 + $0xc0] sm:$0xff]
    %v1690 = vld [vmem:[%s5 + $0xc8] sm:$0xff]
    %v1691 = vld [vmem:[%s5 + $0xd0] sm:$0xff]
    %v1692 = vld [vmem:[%s5 + $0xd8] sm:$0xff]
    %v1693 = vld [vmem:[%s5 + $0xe0] sm:$0xff]
    %v1694 = vld [vmem:[%s5 + $0xe8] sm:$0xff]
    %v1695 = vld [vmem:[%s5 + $0xf0] sm:$0xff]
    %v1696 = vld [vmem:[%s5 + $0xf8] sm:$0xff]
    %v1697 = vsel %vm1216, %v944, 0.0
    %v1698 = vsel %vm1217, %v945, 0.0
    %v1699 = vsel %vm1218, %v946, 0.0
    %v1700 = vsel %vm1219, %v947, 0.0
    %v1701 = vsel %vm1220, %v948, 0.0
    %v1702 = vsel %vm1221, %v949, 0.0
    %v1703 = vsel %vm1222, %v950, 0.0
    %v1704 = vsel %vm1223, %v951, 0.0
    %v1705 = vsel %vm1224, %v952, 0.0
    %v1706 = vsel %vm1225, %v953, 0.0
    %v1707 = vsel %vm1226, %v954, 0.0
    %v1708 = vsel %vm1227, %v955, 0.0
    %v1709 = vsel %vm1228, %v956, 0.0
    %v1710 = vsel %vm1229, %v957, 0.0
    %v1711 = vsel %vm1230, %v958, 0.0
    %v1712 = vsel %vm1231, %v959, 0.0
    %v1713 = vsel %vm1232, %v960, 0.0
    %v1714 = vsel %vm1233, %v961, 0.0
    %v1715 = vsel %vm1234, %v962, 0.0
    %v1716 = vsel %vm1235, %v963, 0.0
    %v1717 = vsel %vm1236, %v964, 0.0
    %v1718 = vsel %vm1237, %v965, 0.0
    %v1719 = vsel %vm1238, %v966, 0.0
    %v1720 = vsel %vm1239, %v967, 0.0
    %v1721 = vsel %vm1240, %v968, 0.0
    %v1722 = vsel %vm1241, %v969, 0.0
    %v1723 = vsel %vm1242, %v970, 0.0
    %v1724 = vsel %vm1243, %v971, 0.0
    %v1725 = vsel %vm1244, %v972, 0.0
    %v1726 = vsel %vm1245, %v973, 0.0
    %v1727 = vsel %vm1246, %v974, 0.0
    %v1728 = vsel %vm1247, %v975, 0.0
    %v1729 = vsel %vm1248, %v976, 0.0
    %v1730 = vsel %vm1249, %v977, 0.0
    %v1731 = vsel %vm1250, %v978, 0.0
    %v1732 = vsel %vm1251, %v979, 0.0
    %v1733 = vsel %vm1252, %v980, 0.0
    %v1734 = vsel %vm1253, %v981, 0.0
    %v1735 = vsel %vm1254, %v982, 0.0
    %v1736 = vsel %vm1255, %v983, 0.0
    %v1737 = vsel %vm1256, %v984, 0.0
    %v1738 = vsel %vm1257, %v985, 0.0
    %v1739 = vsel %vm1258, %v986, 0.0
    %v1740 = vsel %vm1259, %v987, 0.0
    %v1741 = vsel %vm1260, %v988, 0.0
    %v1742 = vsel %vm1261, %v989, 0.0
    %v1743 = vsel %vm1262, %v990, 0.0
    %v1744 = vsel %vm1263, %v991, 0.0
    %v1745 = vsel %vm1264, %v992, 0.0
    %v1746 = vsel %vm1265, %v993, 0.0
    %v1747 = vsel %vm1266, %v994, 0.0
    %v1748 = vsel %vm1267, %v995, 0.0
    %v1749 = vsel %vm1268, %v996, 0.0
    %v1750 = vsel %vm1269, %v997, 0.0
    %v1751 = vsel %vm1270, %v998, 0.0
    %v1752 = vsel %vm1271, %v999, 0.0
    %v1753 = vsel %vm1272, %v1000, 0.0
    %v1754 = vsel %vm1273, %v1001, 0.0
    %v1755 = vsel %vm1274, %v1002, 0.0
    %v1756 = vsel %vm1275, %v1003, 0.0
    %v1757 = vsel %vm1276, %v1004, 0.0
    %v1758 = vsel %vm1277, %v1005, 0.0
    %v1759 = vsel %vm1278, %v1006, 0.0
    %v1760 = vsel %vm1279, %v1007, 0.0
    %v1761 = vadd.f32 %v1697, %v1698
    %1762 = vadd.xlane.f32.xlu0 %v1761
    %v1763 = vpop.xlane.xlu0 %1762
    %v1764 = vadd.f32 %v1699, %v1700
    %1765 = vadd.xlane.f32.xlu0 %v1764
    %v1766 = vpop.xlane.xlu0 %1765
    %v1767 = vadd.f32 %v1701, %v1702
    %1768 = vadd.xlane.f32.xlu0 %v1767
    %v1769 = vpop.xlane.xlu0 %1768
    %v1770 = vadd.f32 %v1703, %v1704
    %1771 = vadd.xlane.f32.xlu0 %v1770
    %v1772 = vpop.xlane.xlu0 %1771
    %v1773 = vadd.f32 %v1705, %v1706
    %1774 = vadd.xlane.f32.xlu0 %v1773
    %v1775 = vpop.xlane.xlu0 %1774
    %v1776 = vadd.f32 %v1707, %v1708
    %1777 = vadd.xlane.f32.xlu0 %v1776
    %v1778 = vpop.xlane.xlu0 %1777
    %v1779 = vadd.f32 %v1709, %v1710
    %1780 = vadd.xlane.f32.xlu0 %v1779
    %v1781 = vpop.xlane.xlu0 %1780
    %v1782 = vadd.f32 %v1711, %v1712
    %1783 = vadd.xlane.f32.xlu0 %v1782
    %v1784 = vpop.xlane.xlu0 %1783
    %v1785 = vadd.f32 %v1713, %v1714
    %1786 = vadd.xlane.f32.xlu0 %v1785
    %v1787 = vpop.xlane.xlu0 %1786
    %v1788 = vadd.f32 %v1715, %v1716
    %1789 = vadd.xlane.f32.xlu0 %v1788
    %v1790 = vpop.xlane.xlu0 %1789
    %v1791 = vadd.f32 %v1717, %v1718
    %1792 = vadd.xlane.f32.xlu0 %v1791
    %v1793 = vpop.xlane.xlu0 %1792
    %v1794 = vadd.f32 %v1719, %v1720
    %1795 = vadd.xlane.f32.xlu0 %v1794
    %v1796 = vpop.xlane.xlu0 %1795
    %v1797 = vadd.f32 %v1721, %v1722
    %1798 = vadd.xlane.f32.xlu0 %v1797
    %v1799 = vpop.xlane.xlu0 %1798
    %v1800 = vadd.f32 %v1723, %v1724
    %1801 = vadd.xlane.f32.xlu0 %v1800
    %v1802 = vpop.xlane.xlu0 %1801
    %v1803 = vadd.f32 %v1725, %v1726
    %1804 = vadd.xlane.f32.xlu0 %v1803
    %v1805 = vpop.xlane.xlu0 %1804
    %v1806 = vadd.f32 %v1727, %v1728
    %1807 = vadd.xlane.f32.xlu0 %v1806
    %v1808 = vpop.xlane.xlu0 %1807
    %v1809 = vadd.f32 %v1729, %v1730
    %1810 = vadd.xlane.f32.xlu0 %v1809
    %v1811 = vpop.xlane.xlu0 %1810
    %v1812 = vadd.f32 %v1731, %v1732
    %1813 = vadd.xlane.f32.xlu0 %v1812
    %v1814 = vpop.xlane.xlu0 %1813
    %v1815 = vadd.f32 %v1733, %v1734
    %1816 = vadd.xlane.f32.xlu0 %v1815
    %v1817 = vpop.xlane.xlu0 %1816
    %v1818 = vadd.f32 %v1735, %v1736
    %1819 = vadd.xlane.f32.xlu0 %v1818
    %v1820 = vpop.xlane.xlu0 %1819
    %v1821 = vadd.f32 %v1737, %v1738
    %1822 = vadd.xlane.f32.xlu0 %v1821
    %v1823 = vpop.xlane.xlu0 %1822
    %v1824 = vadd.f32 %v1739, %v1740
    %1825 = vadd.xlane.f32.xlu0 %v1824
    %v1826 = vpop.xlane.xlu0 %1825
    %v1827 = vadd.f32 %v1741, %v1742
    %1828 = vadd.xlane.f32.xlu0 %v1827
    %v1829 = vpop.xlane.xlu0 %1828
    %v1830 = vadd.f32 %v1743, %v1744
    %1831 = vadd.xlane.f32.xlu0 %v1830
    %v1832 = vpop.xlane.xlu0 %1831
    %v1833 = vadd.f32 %v1745, %v1746
    %1834 = vadd.xlane.f32.xlu0 %v1833
    %v1835 = vpop.xlane.xlu0 %1834
    %v1836 = vadd.f32 %v1747, %v1748
    %1837 = vadd.xlane.f32.xlu0 %v1836
    %v1838 = vpop.xlane.xlu0 %1837
    %v1839 = vadd.f32 %v1749, %v1750
    %1840 = vadd.xlane.f32.xlu0 %v1839
    %v1841 = vpop.xlane.xlu0 %1840
    %v1842 = vadd.f32 %v1751, %v1752
    %1843 = vadd.xlane.f32.xlu0 %v1842
    %v1844 = vpop.xlane.xlu0 %1843
    %v1845 = vadd.f32 %v1753, %v1754
    %1846 = vadd.xlane.f32.xlu0 %v1845
    %v1847 = vpop.xlane.xlu0 %1846
    %v1848 = vadd.f32 %v1755, %v1756
    %1849 = vadd.xlane.f32.xlu0 %v1848
    %v1850 = vpop.xlane.xlu0 %1849
    %v1851 = vadd.f32 %v1757, %v1758
    %1852 = vadd.xlane.f32.xlu0 %v1851
    %v1853 = vpop.xlane.xlu0 %1852
    %v1854 = vadd.f32 %v1759, %v1760
    %1855 = vadd.xlane.f32.xlu0 %v1854
    %v1856 = vpop.xlane.xlu0 %1855
    %v1857 = vadd.f32 %v1665, %v1763
    %v1858 = vadd.f32 %v1666, %v1766
    %v1859 = vadd.f32 %v1667, %v1769
    %v1860 = vadd.f32 %v1668, %v1772
    %v1861 = vadd.f32 %v1669, %v1775
    %v1862 = vadd.f32 %v1670, %v1778
    %v1863 = vadd.f32 %v1671, %v1781
    %v1864 = vadd.f32 %v1672, %v1784
    %v1865 = vadd.f32 %v1673, %v1787
    %v1866 = vadd.f32 %v1674, %v1790
    %v1867 = vadd.f32 %v1675, %v1793
    %v1868 = vadd.f32 %v1676, %v1796
    %v1869 = vadd.f32 %v1677, %v1799
    %v1870 = vadd.f32 %v1678, %v1802
    %v1871 = vadd.f32 %v1679, %v1805
    %v1872 = vadd.f32 %v1680, %v1808
    %v1873 = vadd.f32 %v1681, %v1811
    %v1874 = vadd.f32 %v1682, %v1814
    %v1875 = vadd.f32 %v1683, %v1817
    %v1876 = vadd.f32 %v1684, %v1820
    %v1877 = vadd.f32 %v1685, %v1823
    %v1878 = vadd.f32 %v1686, %v1826
    %v1879 = vadd.f32 %v1687, %v1829
    %v1880 = vadd.f32 %v1688, %v1832
    %v1881 = vadd.f32 %v1689, %v1835
    %v1882 = vadd.f32 %v1690, %v1838
    %v1883 = vadd.f32 %v1691, %v1841
    %v1884 = vadd.f32 %v1692, %v1844
    %v1885 = vadd.f32 %v1693, %v1847
    %v1886 = vadd.f32 %v1694, %v1850
    %v1887 = vadd.f32 %v1695, %v1853
    %v1888 = vadd.f32 %v1696, %v1856
    %1889 = vst.msk [vmem:[%s5] sm:$0xff] %vm1632, %v1857
    %1890 = vst.msk [vmem:[%s5 + $0x8] sm:$0xff] %vm1632, %v1858
    %1891 = vst.msk [vmem:[%s5 + $0x10] sm:$0xff] %vm1632, %v1859
    %1892 = vst.msk [vmem:[%s5 + $0x18] sm:$0xff] %vm1632, %v1860
    %1893 = vst.msk [vmem:[%s5 + $0x20] sm:$0xff] %vm1632, %v1861
    %1894 = vst.msk [vmem:[%s5 + $0x28] sm:$0xff] %vm1632, %v1862
    %1895 = vst.msk [vmem:[%s5 + $0x30] sm:$0xff] %vm1632, %v1863
    %1896 = vst.msk [vmem:[%s5 + $0x38] sm:$0xff] %vm1632, %v1864
    %1897 = vst.msk [vmem:[%s5 + $0x40] sm:$0xff] %vm1632, %v1865
    %1898 = vst.msk [vmem:[%s5 + $0x48] sm:$0xff] %vm1632, %v1866
    %1899 = vst.msk [vmem:[%s5 + $0x50] sm:$0xff] %vm1632, %v1867
    %1900 = vst.msk [vmem:[%s5 + $0x58] sm:$0xff] %vm1632, %v1868
    %1901 = vst.msk [vmem:[%s5 + $0x60] sm:$0xff] %vm1632, %v1869
    %1902 = vst.msk [vmem:[%s5 + $0x68] sm:$0xff] %vm1632, %v1870
    %1903 = vst.msk [vmem:[%s5 + $0x70] sm:$0xff] %vm1632, %v1871
    %1904 = vst.msk [vmem:[%s5 + $0x78] sm:$0xff] %vm1632, %v1872
    %1905 = vst.msk [vmem:[%s5 + $0x80] sm:$0xff] %vm1632, %v1873
    %1906 = vst.msk [vmem:[%s5 + $0x88] sm:$0xff] %vm1632, %v1874
    %1907 = vst.msk [vmem:[%s5 + $0x90] sm:$0xff] %vm1632, %v1875
    %1908 = vst.msk [vmem:[%s5 + $0x98] sm:$0xff] %vm1632, %v1876
    %1909 = vst.msk [vmem:[%s5 + $0xa0] sm:$0xff] %vm1632, %v1877
    %1910 = vst.msk [vmem:[%s5 + $0xa8] sm:$0xff] %vm1632, %v1878
    %1911 = vst.msk [vmem:[%s5 + $0xb0] sm:$0xff] %vm1632, %v1879
    %1912 = vst.msk [vmem:[%s5 + $0xb8] sm:$0xff] %vm1632, %v1880
    %1913 = vst.msk [vmem:[%s5 + $0xc0] sm:$0xff] %vm1632, %v1881
    %1914 = vst.msk [vmem:[%s5 + $0xc8] sm:$0xff] %vm1632, %v1882
    %1915 = vst.msk [vmem:[%s5 + $0xd0] sm:$0xff] %vm1632, %v1883
    %1916 = vst.msk [vmem:[%s5 + $0xd8] sm:$0xff] %vm1632, %v1884
    %1917 = vst.msk [vmem:[%s5 + $0xe0] sm:$0xff] %vm1632, %v1885
    %1918 = vst.msk [vmem:[%s5 + $0xe8] sm:$0xff] %vm1632, %v1886
    %1919 = vst.msk [vmem:[%s5 + $0xf0] sm:$0xff] %vm1632, %v1887
    %1920 = vst.msk [vmem:[%s5 + $0xf8] sm:$0xff] %vm1632, %v1888
    // Predicated region
    $region26: #{tpu_custom_call.1} parent=1 // pred_check
      _
    $region27: #{tpu_custom_call.1} parent=1 // pred_check_branch
      %1922 = sbr.rel (0) target = $region29
    $region28: #{tpu_custom_call.1} parent=1 // pred_region
      _
    $region29: #{tpu_custom_call.1} parent=1 // pred_fallthru
      _
    // Predicated region
    $region30: #{tpu_custom_call.1} parent=1 // pred_check
      _
    $region31: #{tpu_custom_call.1} parent=1 // pred_check_branch
      %1924 = sbr.rel (0) target = $region33
    $region32: #{tpu_custom_call.1} parent=1 // pred_region
      _
    $region33: #{tpu_custom_call.1} parent=1 // pred_fallthru
      _
    // Predicated region
    $region34: #{tpu_custom_call.1} parent=1 // pred_check
      _
    $region35: #{tpu_custom_call.1} parent=1 // pred_check_branch
      %1926 = sbr.rel (0) target = $region37
    $region36: #{tpu_custom_call.1} parent=1 // pred_region
      _
    $region37: #{tpu_custom_call.1} parent=1 // pred_fallthru
      _
    // Predicated region
    $region38: #{tpu_custom_call.1} parent=1 // pred_check
      _
    $region39: #{tpu_custom_call.1} parent=1 // pred_check_branch
      %1928 = sbr.rel (0) target = $region41
    $region40: #{tpu_custom_call.1} parent=1 // pred_region
      _
    $region41: #{tpu_custom_call.1} parent=1 // pred_fallthru
      _
    %1929 = vsyncpa [#allocation3], 1

</llo_original>
